<compile_context>
chip_gen: v5e
topology: v5e:2x2
jax: 0.10.0
libtpu: 0.0.40
codegen_flags: <defaults>
</compile_context>

<pallas_src>
import functools

import jax
import jax.numpy as jnp
from jax.experimental import pallas as pl
from jax.experimental.pallas import tpu as pltpu


# Tile targets: 256/256/512 suit the v6e/v7x MXU and fit v7x's 64 MiB VMEM in bf16;
# they degrade gracefully (to the full dim) at small shapes. On v5e, 128-wide M/N
# tiles are equivalent (its MXU is 4x128x128).
TM_TARGET = 256
TN_TARGET = 256
TK_TARGET = 512
TQ_TARGET = 256
TKV_TARGET = 256


def _pick_tile(dim, target):
    """Largest block size <= target that evenly divides dim."""
    if dim <= target:
        return dim
    t = target
    while dim % t != 0:
        t //= 2
    return t


def _mosaic_params(semantics, block_bytes):
    # 3x covers double-buffered inputs/outputs plus headroom; floor/cap keep the
    # scoped budget sane across v5e/v6e (128 MiB) and v7x (64 MiB physical) VMEM.
    vmem = int(min(max(3 * block_bytes + (2 << 20), 16 << 20), 96 << 20))
    return pltpu.CompilerParams(dimension_semantics=semantics,
                                vmem_limit_bytes=vmem)


# --------------------------------------------------------------------------
# Pallas kernels
# --------------------------------------------------------------------------
def _dense_kernel(x_ref, w_ref, b_ref, o_ref, acc_ref, *, activation):
    @pl.when(pl.program_id(2) == 0)
    def _():
        acc_ref[...] = jnp.zeros(acc_ref.shape, jnp.float32)

    # bf16 operands on the MXU, f32 accumulation.
    acc_ref[...] += jnp.dot(x_ref[...], w_ref[...],
                            preferred_element_type=jnp.float32)

    @pl.when(pl.program_id(2) == pl.num_programs(2) - 1)
    def _():
        y = acc_ref[...] + b_ref[...]      # f32 epilogue (v5e VPU/EUP have no bf16)
        if activation == "gelu":
            # tanh-approximate GELU; exact-erf gelu differs by <1e-3.
            # TODO(synk): exact erf-based GELU once lax.erf Mosaic lowering is confirmed.
            y = 0.5 * y * (1.0 + jnp.tanh(0.7978845608028654 *
                                          (y + 0.044715 * y * y * y)))
        elif activation == "tanh":
            y = jnp.tanh(y)
        o_ref[...] = y.astype(o_ref.dtype)


def dense(x, w, b, activation=None, out_dtype=jnp.bfloat16):
    """x: (M, K) @ w: (K, N) + b -> (M, N), fused activation, bf16 MXU operands."""
    M, K = x.shape
    N = w.shape[1]
    tm = _pick_tile(M, TM_TARGET)
    tn = _pick_tile(N, TN_TARGET)
    tk = _pick_tile(K, TK_TARGET)
    grid = (M // tm, N // tn, K // tk)
    block_bytes = tm * tk * 2 + tk * tn * 2 + tn * 4 + tm * tn * (2 + 4)
    return pl.pallas_call(
        functools.partial(_dense_kernel, activation=activation),
        out_shape=jax.ShapeDtypeStruct((M, N), out_dtype),
        grid=grid,
        in_specs=[pl.BlockSpec((tm, tk), lambda i, j, k: (i, k)),
                  pl.BlockSpec((tk, tn), lambda i, j, k: (k, j)),
                  pl.BlockSpec((1, tn), lambda i, j, k: (0, j))],
        out_specs=pl.BlockSpec((tm, tn), lambda i, j, k: (i, j)),
        scratch_shapes=[pltpu.VMEM((tm, tn), jnp.float32)],
        compiler_params=_mosaic_params(("parallel", "parallel", "arbitrary"),
                                       block_bytes),
    )(x.astype(jnp.bfloat16), w.astype(jnp.bfloat16),
      b.reshape(1, N).astype(jnp.float32))


def _layernorm_kernel(*refs, eps, has_residual):
    if has_residual:
        x_ref, r_ref, g_ref, b_ref, o_ref = refs
        x = x_ref[...].astype(jnp.float32) + r_ref[...].astype(jnp.float32)
    else:
        x_ref, g_ref, b_ref, o_ref = refs
        x = x_ref[...].astype(jnp.float32)
    mu = jnp.mean(x, axis=-1, keepdims=True)
    xc = x - mu
    var = jnp.mean(xc * xc, axis=-1, keepdims=True)
    inv = jax.lax.rsqrt(var + eps)
    o_ref[...] = ((xc * inv) * g_ref[...] + b_ref[...]).astype(o_ref.dtype)


def layernorm(x, g, b, residual=None, eps=1e-12, out_dtype=jnp.bfloat16):
    """Per-row LayerNorm over H (f32 math) with optional fused residual add."""
    M, H = x.shape
    tm = _pick_tile(M, TM_TARGET)
    grid = (M // tm,)
    row_spec = pl.BlockSpec((tm, H), lambda i: (i, 0))
    vec_spec = pl.BlockSpec((1, H), lambda i: (0, 0))
    operands = [x] + ([residual] if residual is not None else []) \
        + [g.reshape(1, H).astype(jnp.float32), b.reshape(1, H).astype(jnp.float32)]
    in_specs = [row_spec] * (2 if residual is not None else 1) + [vec_spec, vec_spec]
    block_bytes = (len(in_specs) + 1) * tm * H * 4
    return pl.pallas_call(
        functools.partial(_layernorm_kernel, eps=eps,
                          has_residual=residual is not None),
        out_shape=jax.ShapeDtypeStruct((M, H), out_dtype),
        grid=grid,
        in_specs=in_specs,
        out_specs=row_spec,
        compiler_params=_mosaic_params(("parallel",), block_bytes),
    )(*operands)


def _flash_attention_kernel(q_ref, k_ref, v_ref, m_ref, o_ref,
                            m_sc, l_sc, acc_sc, *, scale):
    kv = pl.program_id(2)

    @pl.when(kv == 0)
    def _():
        m_sc[...] = jnp.full(m_sc.shape, -jnp.inf, jnp.float32)
        l_sc[...] = jnp.zeros(l_sc.shape, jnp.float32)
        acc_sc[...] = jnp.zeros(acc_sc.shape, jnp.float32)

    q = q_ref[0]          # (tq, dh)  bf16
    k = k_ref[0]          # (tkv, dh) bf16
    v = v_ref[0]          # (tkv, dh) bf16
    s = jax.lax.dot_general(q, k, (((1,), (1,)), ((), ())),
                            preferred_element_type=jnp.float32) * scale
    s = s + m_ref[0]      # additive mask (1, tkv) broadcasts over the query rows

    m_new = jnp.maximum(m_sc[...], jnp.max(s, axis=-1, keepdims=True))
    alpha = jnp.exp(m_sc[...] - m_new)
    p = jnp.exp(s - m_new)
    l_sc[...] = alpha * l_sc[...] + jnp.sum(p, axis=-1, keepdims=True)
    acc_sc[...] = alpha * acc_sc[...] + jnp.dot(p.astype(v.dtype), v,
                                                preferred_element_type=jnp.float32)
    m_sc[...] = m_new

    @pl.when(kv == pl.num_programs(2) - 1)
    def _():
        inv = pl.reciprocal(l_sc[...], approx=True)   # EUP slot, ~free behind MXU
        o_ref[0] = (acc_sc[...] * inv).astype(o_ref.dtype)


def attention(q, k, v, add_mask, scale):
    """q, k, v: (B*heads, S, dh); add_mask: (B*heads, 1, S). Flash-style, blocked."""
    BH, S, D = q.shape
    tq = _pick_tile(S, TQ_TARGET)
    tkv = _pick_tile(S, TKV_TARGET)
    grid = (BH, S // tq, S // tkv)
    block_bytes = (tq * D * 2 + 2 * tkv * D * 2 + tkv * 4
                   + tq * D * 2 + tq * D * 4 + 2 * tq * 4)
    return pl.pallas_call(
        functools.partial(_flash_attention_kernel, scale=scale),
        out_shape=jax.ShapeDtypeStruct((BH, S, D), jnp.bfloat16),
        grid=grid,
        in_specs=[pl.BlockSpec((1, tq, D), lambda b, qi, ki: (b, qi, 0)),
                  pl.BlockSpec((1, tkv, D), lambda b, qi, ki: (b, ki, 0)),
                  pl.BlockSpec((1, tkv, D), lambda b, qi, ki: (b, ki, 0)),
                  pl.BlockSpec((1, 1, tkv), lambda b, qi, ki: (b, 0, ki))],
        out_specs=pl.BlockSpec((1, tq, D), lambda b, qi, ki: (b, qi, 0)),
        scratch_shapes=[pltpu.VMEM((tq, 1), jnp.float32),
                        pltpu.VMEM((tq, 1), jnp.float32),
                        pltpu.VMEM((tq, D), jnp.float32)],
        compiler_params=_mosaic_params(("parallel", "parallel", "arbitrary"),
                                       block_bytes),
    )(q.astype(jnp.bfloat16), k.astype(jnp.bfloat16), v.astype(jnp.bfloat16),
      add_mask.astype(jnp.float32))


# --------------------------------------------------------------------------
# Model: BertModel (embeddings + encoder + pooler) -> dropout -> Linear head
# --------------------------------------------------------------------------
def init_params(key, *, vocab=100, hidden=32, heads=2, n_layers=2, inter=64,
                max_pos=16, type_vocab=2, n_class=1):
    del heads  # static config; passed to the forward fn, not through the pytree
    std = 0.02
    keys = iter(jax.random.split(key, 8 + 8 * n_layers))

    def nrm(shape):
        return (std * jax.random.normal(next(keys), shape)).astype(jnp.float32)

    params = {
        "word_emb": nrm((vocab, hidden)),
        "pos_emb": nrm((max_pos, hidden)),
        "type_emb": nrm((type_vocab, hidden)),
        "emb_ln_g": jnp.ones((hidden,), jnp.float32),
        "emb_ln_b": jnp.zeros((hidden,), jnp.float32),
        "layers": [],
        "pool_w": nrm((hidden, hidden)),
        "pool_b": jnp.zeros((hidden,), jnp.float32),
        "clf_w": nrm((hidden, n_class)),
        "clf_b": jnp.zeros((n_class,), jnp.float32),
    }
    for _ in range(n_layers):
        params["layers"].append({
            # Q|K|V weights stored pre-concatenated -> one fused dense per layer
            # (HF checkpoints' separate q/k/v weights would be concatenated at load).
            "wqkv": nrm((hidden, 3 * hidden)),
            "bqkv": jnp.zeros((3 * hidden,), jnp.float32),
            "wo": nrm((hidden, hidden)), "bo": jnp.zeros((hidden,), jnp.float32),
            "ln1_g": jnp.ones((hidden,), jnp.float32),
            "ln1_b": jnp.zeros((hidden,), jnp.float32),
            "w1": nrm((hidden, inter)), "b1": jnp.zeros((inter,), jnp.float32),
            "w2": nrm((inter, hidden)), "b2": jnp.zeros((hidden,), jnp.float32),
            "ln2_g": jnp.ones((hidden,), jnp.float32),
            "ln2_b": jnp.zeros((hidden,), jnp.float32),
        })
    return params


def roberta_classification_forward(params, input_ids, attention_mask=None,
                                   token_type_ids=None, *, num_heads):
    B, S = input_ids.shape
    H = params["word_emb"].shape[1]     # concrete (weight shape), not a tracer
    nh = num_heads                      # static via functools.partial
    dh = H // nh

    if attention_mask is None:
        attention_mask = jnp.ones((B, S), jnp.float32)
    if token_type_ids is None:
        token_type_ids = jnp.zeros((B, S), jnp.int32)

    # --- embeddings (gathers are glue; LayerNorm is a Pallas kernel) ---
    # The original module wraps BertModel, so BERT-style arange positions apply
    # (no RoBERTa padding_idx+1 offset).
    pos_ids = jnp.arange(S, dtype=jnp.int32)[None, :]
    emb = (params["word_emb"][input_ids]
           + params["pos_emb"][pos_ids]
           + params["type_emb"][token_type_ids])
    x = layernorm(emb.reshape(B * S, H), params["emb_ln_g"], params["emb_ln_b"])

    # HF extended attention mask: (1 - mask) * -10000, broadcast over heads/queries
    ext_mask = (1.0 - attention_mask.astype(jnp.float32)) * -10000.0      # (B, S)
    ext_mask = jnp.broadcast_to(ext_mask[:, None, None, :], (B, nh, 1, S))
    ext_mask = ext_mask.reshape(B * nh, 1, S)

    scale = 1.0 / (dh ** 0.5)

    # TODO(synk): fold the head split/merge into the attention BlockSpec index_map
    # to avoid these HBM-round-tripping transposes (lane-dim constraint blocks a
    # direct per-head column slice when head_dim < 128).
    def split_heads(t):   # (B*S, H) -> (B*nh, S, dh)
        return t.reshape(B, S, nh, dh).transpose(0, 2, 1, 3).reshape(B * nh, S, dh)

    def merge_heads(t):   # (B*nh, S, dh) -> (B*S, H)
        return t.reshape(B, nh, S, dh).transpose(0, 2, 1, 3).reshape(B * S, H)

    for layer in params["layers"]:
        # --- self-attention (fused QKV projection: one launch, 3x K-reuse) ---
        qkv = dense(x, layer["wqkv"], layer["bqkv"])            # (B*S, 3H) bf16
        q, k, v = qkv[:, :H], qkv[:, H:2 * H], qkv[:, 2 * H:]
        ctx = attention(split_heads(q), split_heads(k), split_heads(v),
                        ext_mask, scale)
        attn_out = dense(merge_heads(ctx), layer["wo"], layer["bo"])
        x = layernorm(attn_out, layer["ln1_g"], layer["ln1_b"], residual=x)
        # --- feed-forward ---
        h = dense(x, layer["w1"], layer["b1"], activation="gelu")
        h = dense(h, layer["w2"], layer["b2"])
        x = layernorm(h, layer["ln2_g"], layer["ln2_b"], residual=x)

    hidden_states = x.reshape(B, S, H)

    # --- pooler + classifier head: tiny (B,H)x(H,H) / (H,1) matmuls, below kernel
    # launch overhead (n_class=1 would also force masked stores) -> plain JAX.
    cls = hidden_states[:, 0, :].astype(jnp.float32)
    h_conc = jnp.tanh(cls @ params["pool_w"] + params["pool_b"])
    # clf_dropout=0.15 is identity at inference (eval mode in predict.py)
    logits = h_conc @ params["clf_w"] + params["clf_b"]         # (B, n_class) f32
    return logits


# --------------------------------------------------------------------------
if __name__ == "__main__":
    key = jax.random.PRNGKey(0)
    k_params, k_ids = jax.random.split(key)

    VOCAB, SEQ, BATCH, HIDDEN, HEADS = 100, 8, 2, 32, 2
    params = init_params(k_params, vocab=VOCAB, hidden=HIDDEN, heads=HEADS,
                         n_layers=2, inter=64, max_pos=16, type_vocab=2, n_class=1)

    input_ids = jax.random.randint(k_ids, (BATCH, SEQ), 0, VOCAB, dtype=jnp.int32)
    attention_mask = jnp.ones((BATCH, SEQ), jnp.float32)
    token_type_ids = jnp.zeros((BATCH, SEQ), jnp.int32)

    fwd = jax.jit(functools.partial(roberta_classification_forward,
                                    num_heads=HEADS))
    logits = fwd(params, input_ids, attention_mask, token_type_ids)
    jax.block_until_ready(logits)

    assert logits.shape == (BATCH, 1), logits.shape
    print("KERNEL_OK")
</pallas_src>

<mosaic_0001>
module attributes {stable_mosaic.version = 11 : i64} {
  func.func @_layernorm_kernel(%arg0: i32, %arg1: memref<16x32xf32, #tpu.memory_space<vmem>>, %arg2: memref<1x32xf32, #tpu.memory_space<vmem>>, %arg3: memref<1x32xf32, #tpu.memory_space<vmem>>, %arg4: memref<16x32xbf16, #tpu.memory_space<vmem>>) attributes {dimension_semantics = [#tpu.dimension_semantics<parallel>], iteration_bounds = array<i64: 1>, scalar_prefetch = 0 : i64, scratch_operands = 0 : i64, tpu.core_type = #tpu.core_type<tc>, window_params = [{transform_indices = @transform_0, window_bounds = array<i64: 16, 32>}, {pipeline_mode = #tpu.pipeline_mode<synchronous>, transform_indices = @transform_1, window_bounds = array<i64: 1, 32>}, {pipeline_mode = #tpu.pipeline_mode<synchronous>, transform_indices = @transform_2, window_bounds = array<i64: 1, 32>}, {transform_indices = @transform_3, window_bounds = array<i64: 16, 32>}]} {
    %c0 = arith.constant 0 : index
    %c0_0 = arith.constant 0 : index
    %0 = vector.load %arg1[%c0, %c0_0] : memref<16x32xf32, #tpu.memory_space<vmem>>, vector<16x32xf32>
    %cst = arith.constant dense<0.000000e+00> : vector<16xf32>
    %1 = vector.multi_reduction <add>, %0, %cst [1] : vector<16x32xf32> to vector<16xf32>
    %2 = vector.shape_cast %1 : vector<16xf32> to vector<16x1xf32>
    %cst_1 = arith.constant 3.200000e+01 : f32
    %3 = vector.broadcast %cst_1 : f32 to vector<16x1xf32>
    %4 = arith.divf %2, %3 : vector<16x1xf32>
    %5 = vector.broadcast %4 : vector<16x1xf32> to vector<16x32xf32>
    %6 = arith.subf %0, %5 : vector<16x32xf32>
    %7 = arith.mulf %6, %6 : vector<16x32xf32>
    %cst_2 = arith.constant dense<0.000000e+00> : vector<16xf32>
    %8 = vector.multi_reduction <add>, %7, %cst_2 [1] : vector<16x32xf32> to vector<16xf32>
    %9 = vector.shape_cast %8 : vector<16xf32> to vector<16x1xf32>
    %cst_3 = arith.constant 3.200000e+01 : f32
    %10 = vector.broadcast %cst_3 : f32 to vector<16x1xf32>
    %11 = arith.divf %9, %10 : vector<16x1xf32>
    %cst_4 = arith.constant 9.99999996E-13 : f32
    %12 = vector.broadcast %cst_4 : f32 to vector<16x1xf32>
    %13 = arith.addf %11, %12 : vector<16x1xf32>
    %14 = math.rsqrt %13 : vector<16x1xf32>
    %15 = vector.broadcast %14 : vector<16x1xf32> to vector<16x32xf32>
    %16 = arith.mulf %6, %15 : vector<16x32xf32>
    %c0_5 = arith.constant 0 : index
    %c0_6 = arith.constant 0 : index
    %17 = vector.load %arg2[%c0_5, %c0_6] : memref<1x32xf32, #tpu.memory_space<vmem>>, vector<1x32xf32>
    %18 = vector.broadcast %17 : vector<1x32xf32> to vector<16x32xf32>
    %19 = arith.mulf %16, %18 : vector<16x32xf32>
    %c0_7 = arith.constant 0 : index
    %c0_8 = arith.constant 0 : index
    %20 = vector.load %arg3[%c0_7, %c0_8] : memref<1x32xf32, #tpu.memory_space<vmem>>, vector<1x32xf32>
    %21 = vector.broadcast %20 : vector<1x32xf32> to vector<16x32xf32>
    %22 = arith.addf %19, %21 : vector<16x32xf32>
    %23 = arith.truncf %22 : vector<16x32xf32> to vector<16x32xbf16>
    %c0_9 = arith.constant 0 : index
    %c0_10 = arith.constant 0 : index
    %24 = vector.load %arg4[%c0_9, %c0_10] : memref<16x32xbf16, #tpu.memory_space<vmem>>, vector<16x32xbf16>
    tpu.vector_store %arg4[%c0_9, %c0_10], %23 {strides = array<i32>} : memref<16x32xbf16, #tpu.memory_space<vmem>>, vector<16x32xbf16>,
    return
  }
  func.func @transform_0(%arg0: i32) -> (i32, i32) {
    %c0_i32 = arith.constant 0 : i32
    %c0_i32_0 = arith.constant 0 : i32
    return %arg0, %c0_i32 : i32, i32
  }
  func.func @transform_1(%arg0: i32) -> (i32, i32) {
    %c0_i32 = arith.constant 0 : i32
    %c0_i32_0 = arith.constant 0 : i32
    %c0_i32_1 = arith.constant 0 : i32
    return %c0_i32, %c0_i32_0 : i32, i32
  }
  func.func @transform_2(%arg0: i32) -> (i32, i32) {
    %c0_i32 = arith.constant 0 : i32
    %c0_i32_0 = arith.constant 0 : i32
    %c0_i32_1 = arith.constant 0 : i32
    return %c0_i32, %c0_i32_0 : i32, i32
  }
  func.func @transform_3(%arg0: i32) -> (i32, i32) {
    %c0_i32 = arith.constant 0 : i32
    %c0_i32_0 = arith.constant 0 : i32
    return %arg0, %c0_i32 : i32, i32
  }
}

module attributes {stable_mosaic.version = 11 : i64} {
  func.func @_dense_kernel(%arg0: i32, %arg1: i32, %arg2: i32, %arg3: memref<16x32xbf16, #tpu.memory_space<vmem>>, %arg4: memref<32x96xbf16, #tpu.memory_space<vmem>>, %arg5: memref<1x96xf32, #tpu.memory_space<vmem>>, %arg6: memref<16x96xbf16, #tpu.memory_space<vmem>>, %arg7: memref<16x96xf32, #tpu.memory_space<vmem>>) attributes {dimension_semantics = [#tpu.dimension_semantics<parallel>, #tpu.dimension_semantics<parallel>, #tpu.dimension_semantics<arbitrary>], iteration_bounds = array<i64: 1, 1, 1>, scalar_prefetch = 0 : i64, scratch_operands = 1 : i64, tpu.core_type = #tpu.core_type<tc>, window_params = [{transform_indices = @transform_0, window_bounds = array<i64: 16, 32>}, {transform_indices = @transform_1, window_bounds = array<i64: 32, 96>}, {transform_indices = @transform_2, window_bounds = array<i64: 1, 96>}, {transform_indices = @transform_3, window_bounds = array<i64: 16, 96>}]} {
    %c0_i32 = arith.constant 0 : i32
    %0 = arith.cmpi eq, %arg2, %c0_i32 : i32
    %1 = arith.extui %0 : i1 to i32
    %c0_i32_0 = arith.constant 0 : i32
    %2 = arith.cmpi ne, %1, %c0_i32_0 : i32
    scf.if %2 {
      %cst_10 = arith.constant 0.000000e+00 : f32
      %12 = vector.broadcast %cst_10 : f32 to vector<16x96xf32>
      %c0_11 = arith.constant 0 : index
      %c0_12 = arith.constant 0 : index
      %13 = vector.load %arg7[%c0_11, %c0_12] : memref<16x96xf32, #tpu.memory_space<vmem>>, vector<16x96xf32>
      tpu.vector_store %arg7[%c0_11, %c0_12], %12 {strides = array<i32>} : memref<16x96xf32, #tpu.memory_space<vmem>>, vector<16x96xf32>,
    } else {
    }
    %c0 = arith.constant 0 : index
    %c0_1 = arith.constant 0 : index
    %3 = vector.load %arg7[%c0, %c0_1] : memref<16x96xf32, #tpu.memory_space<vmem>>, vector<16x96xf32>
    %c0_2 = arith.constant 0 : index
    %c0_3 = arith.constant 0 : index
    %4 = vector.load %arg3[%c0_2, %c0_3] : memref<16x32xbf16, #tpu.memory_space<vmem>>, vector<16x32xbf16>
    %c0_4 = arith.constant 0 : index
    %c0_5 = arith.constant 0 : index
    %5 = vector.load %arg4[%c0_4, %c0_5] : memref<32x96xbf16, #tpu.memory_space<vmem>>, vector<32x96xbf16>
    %cst = arith.constant dense<0.000000e+00> : vector<16x96xf32>
    %6 = tpu.matmul %4, %5, %cst {dimension_numbers = #tpu.dot_dimension_numbers<[1], [0], [0], [1], [0, 0, 1, 1], [], []>} : vector<16x32xbf16>, vector<32x96xbf16>, vector<16x96xf32> -> vector<16x96xf32>
    %7 = arith.addf %3, %6 : vector<16x96xf32>
    %c0_6 = arith.constant 0 : index
    %c0_7 = arith.constant 0 : index
    %8 = vector.load %arg7[%c0_6, %c0_7] : memref<16x96xf32, #tpu.memory_space<vmem>>, vector<16x96xf32>
    tpu.vector_store %arg7[%c0_6, %c0_7], %7 {strides = array<i32>} : memref<16x96xf32, #tpu.memory_space<vmem>>, vector<16x96xf32>,
    %c0_i32_8 = arith.constant 0 : i32
    %9 = arith.cmpi eq, %arg2, %c0_i32_8 : i32
    %10 = arith.extui %9 : i1 to i32
    %c0_i32_9 = arith.constant 0 : i32
    %11 = arith.cmpi ne, %10, %c0_i32_9 : i32
    scf.if %11 {
      %c0_10 = arith.constant 0 : index
      %c0_11 = arith.constant 0 : index
      %12 = vector.load %arg7[%c0_10, %c0_11] : memref<16x96xf32, #tpu.memory_space<vmem>>, vector<16x96xf32>
      %c0_12 = arith.constant 0 : index
      %c0_13 = arith.constant 0 : index
      %13 = vector.load %arg5[%c0_12, %c0_13] : memref<1x96xf32, #tpu.memory_space<vmem>>, vector<1x96xf32>
      %14 = vector.broadcast %13 : vector<1x96xf32> to vector<16x96xf32>
      %15 = arith.addf %12, %14 : vector<16x96xf32>
      %16 = arith.truncf %15 : vector<16x96xf32> to vector<16x96xbf16>
      %c0_14 = arith.constant 0 : index
      %c0_15 = arith.constant 0 : index
      %17 = vector.load %arg6[%c0_14, %c0_15] : memref<16x96xbf16, #tpu.memory_space<vmem>>, vector<16x96xbf16>
      tpu.vector_store %arg6[%c0_14, %c0_15], %16 {strides = array<i32>} : memref<16x96xbf16, #tpu.memory_space<vmem>>, vector<16x96xbf16>,
    } else {
    }
    return
  }
  func.func @transform_0(%arg0: i32, %arg1: i32, %arg2: i32) -> (i32, i32) {
    %c0_i32 = arith.constant 0 : i32
    return %arg0, %arg2 : i32, i32
  }
  func.func @transform_1(%arg0: i32, %arg1: i32, %arg2: i32) -> (i32, i32) {
    %c0_i32 = arith.constant 0 : i32
    return %arg2, %arg1 : i32, i32
  }
  func.func @transform_2(%arg0: i32, %arg1: i32, %arg2: i32) -> (i32, i32) {
    %c0_i32 = arith.constant 0 : i32
    %c0_i32_0 = arith.constant 0 : i32
    return %c0_i32, %arg1 : i32, i32
  }
  func.func @transform_3(%arg0: i32, %arg1: i32, %arg2: i32) -> (i32, i32) {
    %c0_i32 = arith.constant 0 : i32
    return %arg0, %arg1 : i32, i32
  }
}

module attributes {stable_mosaic.version = 11 : i64} {
  func.func @_flash_attention_kernel(%arg0: i32, %arg1: i32, %arg2: i32, %arg3: memref<1x8x16xbf16, #tpu.memory_space<vmem>>, %arg4: memref<1x8x16xbf16, #tpu.memory_space<vmem>>, %arg5: memref<1x8x16xbf16, #tpu.memory_space<vmem>>, %arg6: memref<1x1x8xf32, #tpu.memory_space<vmem>>, %arg7: memref<1x8x16xbf16, #tpu.memory_space<vmem>>, %arg8: memref<8x1xf32, #tpu.memory_space<vmem>>, %arg9: memref<8x1xf32, #tpu.memory_space<vmem>>, %arg10: memref<8x16xf32, #tpu.memory_space<vmem>>) attributes {dimension_semantics = [#tpu.dimension_semantics<parallel>, #tpu.dimension_semantics<parallel>, #tpu.dimension_semantics<arbitrary>], iteration_bounds = array<i64: 4, 1, 1>, scalar_prefetch = 0 : i64, scratch_operands = 3 : i64, tpu.core_type = #tpu.core_type<tc>, window_params = [{transform_indices = @transform_0, window_bounds = array<i64: 1, 8, 16>}, {transform_indices = @transform_1, window_bounds = array<i64: 1, 8, 16>}, {transform_indices = @transform_2, window_bounds = array<i64: 1, 8, 16>}, {transform_indices = @transform_3, window_bounds = array<i64: 1, 1, 8>}, {transform_indices = @transform_4, window_bounds = array<i64: 1, 8, 16>}]} {
    %c0_i32 = arith.constant 0 : i32
    %0 = arith.cmpi eq, %arg2, %c0_i32 : i32
    %1 = arith.extui %0 : i1 to i32
    %c0_i32_0 = arith.constant 0 : i32
    %2 = arith.cmpi ne, %1, %c0_i32_0 : i32
    scf.if %2 {
      %cst_32 = arith.constant 0xFF800000 : f32
      %43 = vector.broadcast %cst_32 : f32 to vector<8x1xf32>
      %c0_33 = arith.constant 0 : index
      %c0_34 = arith.constant 0 : index
      %44 = vector.load %arg8[%c0_33, %c0_34] : memref<8x1xf32, #tpu.memory_space<vmem>>, vector<8x1xf32>
      tpu.vector_store %arg8[%c0_33, %c0_34], %43 {strides = array<i32>} : memref<8x1xf32, #tpu.memory_space<vmem>>, vector<8x1xf32>,
      %cst_35 = arith.constant 0.000000e+00 : f32
      %45 = vector.broadcast %cst_35 : f32 to vector<8x1xf32>
      %c0_36 = arith.constant 0 : index
      %c0_37 = arith.constant 0 : index
      %46 = vector.load %arg9[%c0_36, %c0_37] : memref<8x1xf32, #tpu.memory_space<vmem>>, vector<8x1xf32>
      tpu.vector_store %arg9[%c0_36, %c0_37], %45 {strides = array<i32>} : memref<8x1xf32, #tpu.memory_space<vmem>>, vector<8x1xf32>,
      %cst_38 = arith.constant 0.000000e+00 : f32
      %47 = vector.broadcast %cst_38 : f32 to vector<8x16xf32>
      %c0_39 = arith.constant 0 : index
      %c0_40 = arith.constant 0 : index
      %48 = vector.load %arg10[%c0_39, %c0_40] : memref<8x16xf32, #tpu.memory_space<vmem>>, vector<8x16xf32>
      tpu.vector_store %arg10[%c0_39, %c0_40], %47 {strides = array<i32>} : memref<8x16xf32, #tpu.memory_space<vmem>>, vector<8x16xf32>,
    } else {
    }
    %c0 = arith.constant 0 : index
    %c0_1 = arith.constant 0 : index
    %c0_2 = arith.constant 0 : index
    %3 = vector.load %arg3[%c0, %c0_1, %c0_2] : memref<1x8x16xbf16, #tpu.memory_space<vmem>>, vector<1x8x16xbf16>
    %4 = vector.shape_cast %3 : vector<1x8x16xbf16> to vector<8x16xbf16>
    %c0_3 = arith.constant 0 : index
    %c0_4 = arith.constant 0 : index
    %c0_5 = arith.constant 0 : index
    %5 = vector.load %arg4[%c0_3, %c0_4, %c0_5] : memref<1x8x16xbf16, #tpu.memory_space<vmem>>, vector<1x8x16xbf16>
    %6 = vector.shape_cast %5 : vector<1x8x16xbf16> to vector<8x16xbf16>
    %c0_6 = arith.constant 0 : index
    %c0_7 = arith.constant 0 : index
    %c0_8 = arith.constant 0 : index
    %7 = vector.load %arg5[%c0_6, %c0_7, %c0_8] : memref<1x8x16xbf16, #tpu.memory_space<vmem>>, vector<1x8x16xbf16>
    %8 = vector.shape_cast %7 : vector<1x8x16xbf16> to vector<8x16xbf16>
    %cst = arith.constant dense<0.000000e+00> : vector<8x8xf32>
    %9 = tpu.matmul %4, %6, %cst {dimension_numbers = #tpu.dot_dimension_numbers<[1], [1], [0], [0], [0, 0, 1, 0], [], []>} : vector<8x16xbf16>, vector<8x16xbf16>, vector<8x8xf32> -> vector<8x8xf32>
    %cst_9 = arith.constant 2.500000e-01 : f32
    %10 = vector.broadcast %cst_9 : f32 to vector<8x8xf32>
    %11 = arith.mulf %9, %10 : vector<8x8xf32>
    %c0_10 = arith.constant 0 : index
    %c0_11 = arith.constant 0 : index
    %c0_12 = arith.constant 0 : index
    %12 = vector.load %arg6[%c0_10, %c0_11, %c0_12] : memref<1x1x8xf32, #tpu.memory_space<vmem>>, vector<1x1x8xf32>
    %13 = vector.shape_cast %12 : vector<1x1x8xf32> to vector<1x8xf32>
    %14 = vector.broadcast %13 : vector<1x8xf32> to vector<8x8xf32>
    %15 = arith.addf %11, %14 : vector<8x8xf32>
    %c0_13 = arith.constant 0 : index
    %c0_14 = arith.constant 0 : index
    %16 = vector.load %arg8[%c0_13, %c0_14] : memref<8x1xf32, #tpu.memory_space<vmem>>, vector<8x1xf32>
    %cst_15 = arith.constant dense<0xFF800000> : vector<8xf32>
    %17 = vector.multi_reduction <maximumf>, %15, %cst_15 [1] : vector<8x8xf32> to vector<8xf32>
    %18 = vector.shape_cast %17 : vector<8xf32> to vector<8x1xf32>
    %19 = arith.maximumf %16, %18 : vector<8x1xf32>
    %c0_16 = arith.constant 0 : index
    %c0_17 = arith.constant 0 : index
    %20 = vector.load %arg8[%c0_16, %c0_17] : memref<8x1xf32, #tpu.memory_space<vmem>>, vector<8x1xf32>
    %21 = arith.subf %20, %19 : vector<8x1xf32>
    %22 = math.exp %21 : vector<8x1xf32>
    %23 = vector.broadcast %19 : vector<8x1xf32> to vector<8x8xf32>
    %24 = arith.subf %15, %23 : vector<8x8xf32>
    %25 = math.exp %24 : vector<8x8xf32>
    %c0_18 = arith.constant 0 : index
    %c0_19 = arith.constant 0 : index
    %26 = vector.load %arg9[%c0_18, %c0_19] : memref<8x1xf32, #tpu.memory_space<vmem>>, vector<8x1xf32>
    %27 = arith.mulf %22, %26 : vector<8x1xf32>
    %cst_20 = arith.constant dense<0.000000e+00> : vector<8xf32>
    %28 = vector.multi_reduction <add>, %25, %cst_20 [1] : vector<8x8xf32> to vector<8xf32>
    %29 = vector.shape_cast %28 : vector<8xf32> to vector<8x1xf32>
    %30 = arith.addf %27, %29 : vector<8x1xf32>
    %c0_21 = arith.constant 0 : index
    %c0_22 = arith.constant 0 : index
    %31 = vector.load %arg9[%c0_21, %c0_22] : memref<8x1xf32, #tpu.memory_space<vmem>>, vector<8x1xf32>
    tpu.vector_store %arg9[%c0_21, %c0_22], %30 {strides = array<i32>} : memref<8x1xf32, #tpu.memory_space<vmem>>, vector<8x1xf32>,
    %c0_23 = arith.constant 0 : index
    %c0_24 = arith.constant 0 : index
    %32 = vector.load %arg10[%c0_23, %c0_24] : memref<8x16xf32, #tpu.memory_space<vmem>>, vector<8x16xf32>
    %33 = vector.broadcast %22 : vector<8x1xf32> to vector<8x16xf32>
    %34 = arith.mulf %33, %32 : vector<8x16xf32>
    %35 = arith.truncf %25 : vector<8x8xf32> to vector<8x8xbf16>
    %cst_25 = arith.constant dense<0.000000e+00> : vector<8x16xf32>
    %36 = tpu.matmul %35, %8, %cst_25 {dimension_numbers = #tpu.dot_dimension_numbers<[1], [0], [0], [1], [0, 0, 1, 1], [], []>} : vector<8x8xbf16>, vector<8x16xbf16>, vector<8x16xf32> -> vector<8x16xf32>
    %37 = arith.addf %34, %36 : vector<8x16xf32>
    %c0_26 = arith.constant 0 : index
    %c0_27 = arith.constant 0 : index
    %38 = vector.load %arg10[%c0_26, %c0_27] : memref<8x16xf32, #tpu.memory_space<vmem>>, vector<8x16xf32>
    tpu.vector_store %arg10[%c0_26, %c0_27], %37 {strides = array<i32>} : memref<8x16xf32, #tpu.memory_space<vmem>>, vector<8x16xf32>,
    %c0_28 = arith.constant 0 : index
    %c0_29 = arith.constant 0 : index
    %39 = vector.load %arg8[%c0_28, %c0_29] : memref<8x1xf32, #tpu.memory_space<vmem>>, vector<8x1xf32>
    tpu.vector_store %arg8[%c0_28, %c0_29], %19 {strides = array<i32>} : memref<8x1xf32, #tpu.memory_space<vmem>>, vector<8x1xf32>,
    %c0_i32_30 = arith.constant 0 : i32
    %40 = arith.cmpi eq, %arg2, %c0_i32_30 : i32
    %41 = arith.extui %40 : i1 to i32
    %c0_i32_31 = arith.constant 0 : i32
    %42 = arith.cmpi ne, %41, %c0_i32_31 : i32
    scf.if %42 {
      %c0_32 = arith.constant 0 : index
      %c0_33 = arith.constant 0 : index
      %43 = vector.load %arg9[%c0_32, %c0_33] : memref<8x1xf32, #tpu.memory_space<vmem>>, vector<8x1xf32>
      %44 = tpu.reciprocal %43 {approx = true} : vector<8x1xf32> -> vector<8x1xf32>
      %c0_34 = arith.constant 0 : index
      %c0_35 = arith.constant 0 : index
      %45 = vector.load %arg10[%c0_34, %c0_35] : memref<8x16xf32, #tpu.memory_space<vmem>>, vector<8x16xf32>
      %46 = vector.broadcast %44 : vector<8x1xf32> to vector<8x16xf32>
      %47 = arith.mulf %45, %46 : vector<8x16xf32>
      %48 = arith.truncf %47 : vector<8x16xf32> to vector<8x16xbf16>
      %c0_36 = arith.constant 0 : index
      %c0_37 = arith.constant 0 : index
      %c0_38 = arith.constant 0 : index
      %49 = vector.load %arg7[%c0_36, %c0_37, %c0_38] : memref<1x8x16xbf16, #tpu.memory_space<vmem>>, vector<1x8x16xbf16>
      %50 = vector.shape_cast %49 : vector<1x8x16xbf16> to vector<8x16xbf16>
      %51 = vector.shape_cast %48 : vector<8x16xbf16> to vector<1x8x16xbf16>
      tpu.vector_store %arg7[%c0_36, %c0_37, %c0_38], %51 {strides = array<i32>} : memref<1x8x16xbf16, #tpu.memory_space<vmem>>, vector<1x8x16xbf16>,
    } else {
    }
    return
  }
  func.func @transform_0(%arg0: i32, %arg1: i32, %arg2: i32) -> (i32, i32, i32) {
    %c0_i32 = arith.constant 0 : i32
    %c0_i32_0 = arith.constant 0 : i32
    return %arg0, %arg1, %c0_i32 : i32, i32, i32
  }
  func.func @transform_1(%arg0: i32, %arg1: i32, %arg2: i32) -> (i32, i32, i32) {
    %c0_i32 = arith.constant 0 : i32
    %c0_i32_0 = arith.constant 0 : i32
    return %arg0, %arg2, %c0_i32 : i32, i32, i32
  }
  func.func @transform_2(%arg0: i32, %arg1: i32, %arg2: i32) -> (i32, i32, i32) {
    %c0_i32 = arith.constant 0 : i32
    %c0_i32_0 = arith.constant 0 : i32
    return %arg0, %arg2, %c0_i32 : i32, i32, i32
  }
  func.func @transform_3(%arg0: i32, %arg1: i32, %arg2: i32) -> (i32, i32, i32) {
    %c0_i32 = arith.constant 0 : i32
    %c0_i32_0 = arith.constant 0 : i32
    return %arg0, %c0_i32, %arg2 : i32, i32, i32
  }
  func.func @transform_4(%arg0: i32, %arg1: i32, %arg2: i32) -> (i32, i32, i32) {
    %c0_i32 = arith.constant 0 : i32
    %c0_i32_0 = arith.constant 0 : i32
    return %arg0, %arg1, %c0_i32 : i32, i32, i32
  }
}

module attributes {stable_mosaic.version = 11 : i64} {
  func.func @_dense_kernel(%arg0: i32, %arg1: i32, %arg2: i32, %arg3: memref<16x32xbf16, #tpu.memory_space<vmem>>, %arg4: memref<32x32xbf16, #tpu.memory_space<vmem>>, %arg5: memref<1x32xf32, #tpu.memory_space<vmem>>, %arg6: memref<16x32xbf16, #tpu.memory_space<vmem>>, %arg7: memref<16x32xf32, #tpu.memory_space<vmem>>) attributes {dimension_semantics = [#tpu.dimension_semantics<parallel>, #tpu.dimension_semantics<parallel>, #tpu.dimension_semantics<arbitrary>], iteration_bounds = array<i64: 1, 1, 1>, scalar_prefetch = 0 : i64, scratch_operands = 1 : i64, tpu.core_type = #tpu.core_type<tc>, window_params = [{transform_indices = @transform_0, window_bounds = array<i64: 16, 32>}, {transform_indices = @transform_1, window_bounds = array<i64: 32, 32>}, {transform_indices = @transform_2, window_bounds = array<i64: 1, 32>}, {transform_indices = @transform_3, window_bounds = array<i64: 16, 32>}]} {
    %c0_i32 = arith.constant 0 : i32
    %0 = arith.cmpi eq, %arg2, %c0_i32 : i32
    %1 = arith.extui %0 : i1 to i32
    %c0_i32_0 = arith.constant 0 : i32
    %2 = arith.cmpi ne, %1, %c0_i32_0 : i32
    scf.if %2 {
      %cst_10 = arith.constant 0.000000e+00 : f32
      %12 = vector.broadcast %cst_10 : f32 to vector<16x32xf32>
      %c0_11 = arith.constant 0 : index
      %c0_12 = arith.constant 0 : index
      %13 = vector.load %arg7[%c0_11, %c0_12] : memref<16x32xf32, #tpu.memory_space<vmem>>, vector<16x32xf32>
      tpu.vector_store %arg7[%c0_11, %c0_12], %12 {strides = array<i32>} : memref<16x32xf32, #tpu.memory_space<vmem>>, vector<16x32xf32>,
    } else {
    }
    %c0 = arith.constant 0 : index
    %c0_1 = arith.constant 0 : index
    %3 = vector.load %arg7[%c0, %c0_1] : memref<16x32xf32, #tpu.memory_space<vmem>>, vector<16x32xf32>
    %c0_2 = arith.constant 0 : index
    %c0_3 = arith.constant 0 : index
    %4 = vector.load %arg3[%c0_2, %c0_3] : memref<16x32xbf16, #tpu.memory_space<vmem>>, vector<16x32xbf16>
    %c0_4 = arith.constant 0 : index
    %c0_5 = arith.constant 0 : index
    %5 = vector.load %arg4[%c0_4, %c0_5] : memref<32x32xbf16, #tpu.memory_space<vmem>>, vector<32x32xbf16>
    %cst = arith.constant dense<0.000000e+00> : vector<16x32xf32>
    %6 = tpu.matmul %4, %5, %cst {dimension_numbers = #tpu.dot_dimension_numbers<[1], [0], [0], [1], [0, 0, 1, 1], [], []>} : vector<16x32xbf16>, vector<32x32xbf16>, vector<16x32xf32> -> vector<16x32xf32>
    %7 = arith.addf %3, %6 : vector<16x32xf32>
    %c0_6 = arith.constant 0 : index
    %c0_7 = arith.constant 0 : index
    %8 = vector.load %arg7[%c0_6, %c0_7] : memref<16x32xf32, #tpu.memory_space<vmem>>, vector<16x32xf32>
    tpu.vector_store %arg7[%c0_6, %c0_7], %7 {strides = array<i32>} : memref<16x32xf32, #tpu.memory_space<vmem>>, vector<16x32xf32>,
    %c0_i32_8 = arith.constant 0 : i32
    %9 = arith.cmpi eq, %arg2, %c0_i32_8 : i32
    %10 = arith.extui %9 : i1 to i32
    %c0_i32_9 = arith.constant 0 : i32
    %11 = arith.cmpi ne, %10, %c0_i32_9 : i32
    scf.if %11 {
      %c0_10 = arith.constant 0 : index
      %c0_11 = arith.constant 0 : index
      %12 = vector.load %arg7[%c0_10, %c0_11] : memref<16x32xf32, #tpu.memory_space<vmem>>, vector<16x32xf32>
      %c0_12 = arith.constant 0 : index
      %c0_13 = arith.constant 0 : index
      %13 = vector.load %arg5[%c0_12, %c0_13] : memref<1x32xf32, #tpu.memory_space<vmem>>, vector<1x32xf32>
      %14 = vector.broadcast %13 : vector<1x32xf32> to vector<16x32xf32>
      %15 = arith.addf %12, %14 : vector<16x32xf32>
      %16 = arith.truncf %15 : vector<16x32xf32> to vector<16x32xbf16>
      %c0_14 = arith.constant 0 : index
      %c0_15 = arith.constant 0 : index
      %17 = vector.load %arg6[%c0_14, %c0_15] : memref<16x32xbf16, #tpu.memory_space<vmem>>, vector<16x32xbf16>
      tpu.vector_store %arg6[%c0_14, %c0_15], %16 {strides = array<i32>} : memref<16x32xbf16, #tpu.memory_space<vmem>>, vector<16x32xbf16>,
    } else {
    }
    return
  }
  func.func @transform_0(%arg0: i32, %arg1: i32, %arg2: i32) -> (i32, i32) {
    %c0_i32 = arith.constant 0 : i32
    return %arg0, %arg2 : i32, i32
  }
  func.func @transform_1(%arg0: i32, %arg1: i32, %arg2: i32) -> (i32, i32) {
    %c0_i32 = arith.constant 0 : i32
    return %arg2, %arg1 : i32, i32
  }
  func.func @transform_2(%arg0: i32, %arg1: i32, %arg2: i32) -> (i32, i32) {
    %c0_i32 = arith.constant 0 : i32
    %c0_i32_0 = arith.constant 0 : i32
    return %c0_i32, %arg1 : i32, i32
  }
  func.func @transform_3(%arg0: i32, %arg1: i32, %arg2: i32) -> (i32, i32) {
    %c0_i32 = arith.constant 0 : i32
    return %arg0, %arg1 : i32, i32
  }
}

module attributes {stable_mosaic.version = 11 : i64} {
  func.func @_layernorm_kernel(%arg0: i32, %arg1: memref<16x32xbf16, #tpu.memory_space<vmem>>, %arg2: memref<16x32xbf16, #tpu.memory_space<vmem>>, %arg3: memref<1x32xf32, #tpu.memory_space<vmem>>, %arg4: memref<1x32xf32, #tpu.memory_space<vmem>>, %arg5: memref<16x32xbf16, #tpu.memory_space<vmem>>) attributes {dimension_semantics = [#tpu.dimension_semantics<parallel>], iteration_bounds = array<i64: 1>, scalar_prefetch = 0 : i64, scratch_operands = 0 : i64, tpu.core_type = #tpu.core_type<tc>, window_params = [{transform_indices = @transform_0, window_bounds = array<i64: 16, 32>}, {transform_indices = @transform_1, window_bounds = array<i64: 16, 32>}, {pipeline_mode = #tpu.pipeline_mode<synchronous>, transform_indices = @transform_2, window_bounds = array<i64: 1, 32>}, {pipeline_mode = #tpu.pipeline_mode<synchronous>, transform_indices = @transform_3, window_bounds = array<i64: 1, 32>}, {transform_indices = @transform_4, window_bounds = array<i64: 16, 32>}]} {
    %c0 = arith.constant 0 : index
    %c0_0 = arith.constant 0 : index
    %0 = vector.load %arg1[%c0, %c0_0] : memref<16x32xbf16, #tpu.memory_space<vmem>>, vector<16x32xbf16>
    %1 = arith.extf %0 : vector<16x32xbf16> to vector<16x32xf32>
    %c0_1 = arith.constant 0 : index
    %c0_2 = arith.constant 0 : index
    %2 = vector.load %arg2[%c0_1, %c0_2] : memref<16x32xbf16, #tpu.memory_space<vmem>>, vector<16x32xbf16>
    %3 = arith.extf %2 : vector<16x32xbf16> to vector<16x32xf32>
    %4 = arith.addf %1, %3 : vector<16x32xf32>
    %cst = arith.constant dense<0.000000e+00> : vector<16xf32>
    %5 = vector.multi_reduction <add>, %4, %cst [1] : vector<16x32xf32> to vector<16xf32>
    %6 = vector.shape_cast %5 : vector<16xf32> to vector<16x1xf32>
    %cst_3 = arith.constant 3.200000e+01 : f32
    %7 = vector.broadcast %cst_3 : f32 to vector<16x1xf32>
    %8 = arith.divf %6, %7 : vector<16x1xf32>
    %9 = vector.broadcast %8 : vector<16x1xf32> to vector<16x32xf32>
    %10 = arith.subf %4, %9 : vector<16x32xf32>
    %11 = arith.mulf %10, %10 : vector<16x32xf32>
    %cst_4 = arith.constant dense<0.000000e+00> : vector<16xf32>
    %12 = vector.multi_reduction <add>, %11, %cst_4 [1] : vector<16x32xf32> to vector<16xf32>
    %13 = vector.shape_cast %12 : vector<16xf32> to vector<16x1xf32>
    %cst_5 = arith.constant 3.200000e+01 : f32
    %14 = vector.broadcast %cst_5 : f32 to vector<16x1xf32>
    %15 = arith.divf %13, %14 : vector<16x1xf32>
    %cst_6 = arith.constant 9.99999996E-13 : f32
    %16 = vector.broadcast %cst_6 : f32 to vector<16x1xf32>
    %17 = arith.addf %15, %16 : vector<16x1xf32>
    %18 = math.rsqrt %17 : vector<16x1xf32>
    %19 = vector.broadcast %18 : vector<16x1xf32> to vector<16x32xf32>
    %20 = arith.mulf %10, %19 : vector<16x32xf32>
    %c0_7 = arith.constant 0 : index
    %c0_8 = arith.constant 0 : index
    %21 = vector.load %arg3[%c0_7, %c0_8] : memref<1x32xf32, #tpu.memory_space<vmem>>, vector<1x32xf32>
    %22 = vector.broadcast %21 : vector<1x32xf32> to vector<16x32xf32>
    %23 = arith.mulf %20, %22 : vector<16x32xf32>
    %c0_9 = arith.constant 0 : index
    %c0_10 = arith.constant 0 : index
    %24 = vector.load %arg4[%c0_9, %c0_10] : memref<1x32xf32, #tpu.memory_space<vmem>>, vector<1x32xf32>
    %25 = vector.broadcast %24 : vector<1x32xf32> to vector<16x32xf32>
    %26 = arith.addf %23, %25 : vector<16x32xf32>
    %27 = arith.truncf %26 : vector<16x32xf32> to vector<16x32xbf16>
    %c0_11 = arith.constant 0 : index
    %c0_12 = arith.constant 0 : index
    %28 = vector.load %arg5[%c0_11, %c0_12] : memref<16x32xbf16, #tpu.memory_space<vmem>>, vector<16x32xbf16>
    tpu.vector_store %arg5[%c0_11, %c0_12], %27 {strides = array<i32>} : memref<16x32xbf16, #tpu.memory_space<vmem>>, vector<16x32xbf16>,
    return
  }
  func.func @transform_0(%arg0: i32) -> (i32, i32) {
    %c0_i32 = arith.constant 0 : i32
    %c0_i32_0 = arith.constant 0 : i32
    return %arg0, %c0_i32 : i32, i32
  }
  func.func @transform_1(%arg0: i32) -> (i32, i32) {
    %c0_i32 = arith.constant 0 : i32
    %c0_i32_0 = arith.constant 0 : i32
    return %arg0, %c0_i32 : i32, i32
  }
  func.func @transform_2(%arg0: i32) -> (i32, i32) {
    %c0_i32 = arith.constant 0 : i32
    %c0_i32_0 = arith.constant 0 : i32
    %c0_i32_1 = arith.constant 0 : i32
    return %c0_i32, %c0_i32_0 : i32, i32
  }
  func.func @transform_3(%arg0: i32) -> (i32, i32) {
    %c0_i32 = arith.constant 0 : i32
    %c0_i32_0 = arith.constant 0 : i32
    %c0_i32_1 = arith.constant 0 : i32
    return %c0_i32, %c0_i32_0 : i32, i32
  }
  func.func @transform_4(%arg0: i32) -> (i32, i32) {
    %c0_i32 = arith.constant 0 : i32
    %c0_i32_0 = arith.constant 0 : i32
    return %arg0, %c0_i32 : i32, i32
  }
}

module attributes {stable_mosaic.version = 11 : i64} {
  func.func @_dense_kernel(%arg0: i32, %arg1: i32, %arg2: i32, %arg3: memref<16x32xbf16, #tpu.memory_space<vmem>>, %arg4: memref<32x64xbf16, #tpu.memory_space<vmem>>, %arg5: memref<1x64xf32, #tpu.memory_space<vmem>>, %arg6: memref<16x64xbf16, #tpu.memory_space<vmem>>, %arg7: memref<16x64xf32, #tpu.memory_space<vmem>>) attributes {dimension_semantics = [#tpu.dimension_semantics<parallel>, #tpu.dimension_semantics<parallel>, #tpu.dimension_semantics<arbitrary>], iteration_bounds = array<i64: 1, 1, 1>, scalar_prefetch = 0 : i64, scratch_operands = 1 : i64, tpu.core_type = #tpu.core_type<tc>, window_params = [{transform_indices = @transform_0, window_bounds = array<i64: 16, 32>}, {transform_indices = @transform_1, window_bounds = array<i64: 32, 64>}, {transform_indices = @transform_2, window_bounds = array<i64: 1, 64>}, {transform_indices = @transform_3, window_bounds = array<i64: 16, 64>}]} {
    %c0_i32 = arith.constant 0 : i32
    %0 = arith.cmpi eq, %arg2, %c0_i32 : i32
    %1 = arith.extui %0 : i1 to i32
    %c0_i32_0 = arith.constant 0 : i32
    %2 = arith.cmpi ne, %1, %c0_i32_0 : i32
    scf.if %2 {
      %cst_10 = arith.constant 0.000000e+00 : f32
      %12 = vector.broadcast %cst_10 : f32 to vector<16x64xf32>
      %c0_11 = arith.constant 0 : index
      %c0_12 = arith.constant 0 : index
      %13 = vector.load %arg7[%c0_11, %c0_12] : memref<16x64xf32, #tpu.memory_space<vmem>>, vector<16x64xf32>
      tpu.vector_store %arg7[%c0_11, %c0_12], %12 {strides = array<i32>} : memref<16x64xf32, #tpu.memory_space<vmem>>, vector<16x64xf32>,
    } else {
    }
    %c0 = arith.constant 0 : index
    %c0_1 = arith.constant 0 : index
    %3 = vector.load %arg7[%c0, %c0_1] : memref<16x64xf32, #tpu.memory_space<vmem>>, vector<16x64xf32>
    %c0_2 = arith.constant 0 : index
    %c0_3 = arith.constant 0 : index
    %4 = vector.load %arg3[%c0_2, %c0_3] : memref<16x32xbf16, #tpu.memory_space<vmem>>, vector<16x32xbf16>
    %c0_4 = arith.constant 0 : index
    %c0_5 = arith.constant 0 : index
    %5 = vector.load %arg4[%c0_4, %c0_5] : memref<32x64xbf16, #tpu.memory_space<vmem>>, vector<32x64xbf16>
    %cst = arith.constant dense<0.000000e+00> : vector<16x64xf32>
    %6 = tpu.matmul %4, %5, %cst {dimension_numbers = #tpu.dot_dimension_numbers<[1], [0], [0], [1], [0, 0, 1, 1], [], []>} : vector<16x32xbf16>, vector<32x64xbf16>, vector<16x64xf32> -> vector<16x64xf32>
    %7 = arith.addf %3, %6 : vector<16x64xf32>
    %c0_6 = arith.constant 0 : index
    %c0_7 = arith.constant 0 : index
    %8 = vector.load %arg7[%c0_6, %c0_7] : memref<16x64xf32, #tpu.memory_space<vmem>>, vector<16x64xf32>
    tpu.vector_store %arg7[%c0_6, %c0_7], %7 {strides = array<i32>} : memref<16x64xf32, #tpu.memory_space<vmem>>, vector<16x64xf32>,
    %c0_i32_8 = arith.constant 0 : i32
    %9 = arith.cmpi eq, %arg2, %c0_i32_8 : i32
    %10 = arith.extui %9 : i1 to i32
    %c0_i32_9 = arith.constant 0 : i32
    %11 = arith.cmpi ne, %10, %c0_i32_9 : i32
    scf.if %11 {
      %c0_10 = arith.constant 0 : index
      %c0_11 = arith.constant 0 : index
      %12 = vector.load %arg7[%c0_10, %c0_11] : memref<16x64xf32, #tpu.memory_space<vmem>>, vector<16x64xf32>
      %c0_12 = arith.constant 0 : index
      %c0_13 = arith.constant 0 : index
      %13 = vector.load %arg5[%c0_12, %c0_13] : memref<1x64xf32, #tpu.memory_space<vmem>>, vector<1x64xf32>
      %14 = vector.broadcast %13 : vector<1x64xf32> to vector<16x64xf32>
      %15 = arith.addf %12, %14 : vector<16x64xf32>
      %cst_14 = arith.constant 5.000000e-01 : f32
      %16 = vector.broadcast %cst_14 : f32 to vector<16x64xf32>
      %17 = arith.mulf %16, %15 : vector<16x64xf32>
      %cst_15 = arith.constant 4.471500e-02 : f32
      %18 = vector.broadcast %cst_15 : f32 to vector<16x64xf32>
      %19 = arith.mulf %18, %15 : vector<16x64xf32>
      %20 = arith.mulf %19, %15 : vector<16x64xf32>
      %21 = arith.mulf %20, %15 : vector<16x64xf32>
      %22 = arith.addf %15, %21 : vector<16x64xf32>
      %cst_16 = arith.constant 0.797884583 : f32
      %23 = vector.broadcast %cst_16 : f32 to vector<16x64xf32>
      %24 = arith.mulf %23, %22 : vector<16x64xf32>
      %25 = math.tanh %24 : vector<16x64xf32>
      %cst_17 = arith.constant 1.000000e+00 : f32
      %26 = vector.broadcast %cst_17 : f32 to vector<16x64xf32>
      %27 = arith.addf %26, %25 : vector<16x64xf32>
      %28 = arith.mulf %17, %27 : vector<16x64xf32>
      %29 = arith.truncf %28 : vector<16x64xf32> to vector<16x64xbf16>
      %c0_18 = arith.constant 0 : index
      %c0_19 = arith.constant 0 : index
      %30 = vector.load %arg6[%c0_18, %c0_19] : memref<16x64xbf16, #tpu.memory_space<vmem>>, vector<16x64xbf16>
      tpu.vector_store %arg6[%c0_18, %c0_19], %29 {strides = array<i32>} : memref<16x64xbf16, #tpu.memory_space<vmem>>, vector<16x64xbf16>,
    } else {
    }
    return
  }
  func.func @transform_0(%arg0: i32, %arg1: i32, %arg2: i32) -> (i32, i32) {
    %c0_i32 = arith.constant 0 : i32
    return %arg0, %arg2 : i32, i32
  }
  func.func @transform_1(%arg0: i32, %arg1: i32, %arg2: i32) -> (i32, i32) {
    %c0_i32 = arith.constant 0 : i32
    return %arg2, %arg1 : i32, i32
  }
  func.func @transform_2(%arg0: i32, %arg1: i32, %arg2: i32) -> (i32, i32) {
    %c0_i32 = arith.constant 0 : i32
    %c0_i32_0 = arith.constant 0 : i32
    return %c0_i32, %arg1 : i32, i32
  }
  func.func @transform_3(%arg0: i32, %arg1: i32, %arg2: i32) -> (i32, i32) {
    %c0_i32 = arith.constant 0 : i32
    return %arg0, %arg1 : i32, i32
  }
}

module attributes {stable_mosaic.version = 11 : i64} {
  func.func @_dense_kernel(%arg0: i32, %arg1: i32, %arg2: i32, %arg3: memref<16x64xbf16, #tpu.memory_space<vmem>>, %arg4: memref<64x32xbf16, #tpu.memory_space<vmem>>, %arg5: memref<1x32xf32, #tpu.memory_space<vmem>>, %arg6: memref<16x32xbf16, #tpu.memory_space<vmem>>, %arg7: memref<16x32xf32, #tpu.memory_space<vmem>>) attributes {dimension_semantics = [#tpu.dimension_semantics<parallel>, #tpu.dimension_semantics<parallel>, #tpu.dimension_semantics<arbitrary>], iteration_bounds = array<i64: 1, 1, 1>, scalar_prefetch = 0 : i64, scratch_operands = 1 : i64, tpu.core_type = #tpu.core_type<tc>, window_params = [{transform_indices = @transform_0, window_bounds = array<i64: 16, 64>}, {transform_indices = @transform_1, window_bounds = array<i64: 64, 32>}, {transform_indices = @transform_2, window_bounds = array<i64: 1, 32>}, {transform_indices = @transform_3, window_bounds = array<i64: 16, 32>}]} {
    %c0_i32 = arith.constant 0 : i32
    %0 = arith.cmpi eq, %arg2, %c0_i32 : i32
    %1 = arith.extui %0 : i1 to i32
    %c0_i32_0 = arith.constant 0 : i32
    %2 = arith.cmpi ne, %1, %c0_i32_0 : i32
    scf.if %2 {
      %cst_10 = arith.constant 0.000000e+00 : f32
      %12 = vector.broadcast %cst_10 : f32 to vector<16x32xf32>
      %c0_11 = arith.constant 0 : index
      %c0_12 = arith.constant 0 : index
      %13 = vector.load %arg7[%c0_11, %c0_12] : memref<16x32xf32, #tpu.memory_space<vmem>>, vector<16x32xf32>
      tpu.vector_store %arg7[%c0_11, %c0_12], %12 {strides = array<i32>} : memref<16x32xf32, #tpu.memory_space<vmem>>, vector<16x32xf32>,
    } else {
    }
    %c0 = arith.constant 0 : index
    %c0_1 = arith.constant 0 : index
    %3 = vector.load %arg7[%c0, %c0_1] : memref<16x32xf32, #tpu.memory_space<vmem>>, vector<16x32xf32>
    %c0_2 = arith.constant 0 : index
    %c0_3 = arith.constant 0 : index
    %4 = vector.load %arg3[%c0_2, %c0_3] : memref<16x64xbf16, #tpu.memory_space<vmem>>, vector<16x64xbf16>
    %c0_4 = arith.constant 0 : index
    %c0_5 = arith.constant 0 : index
    %5 = vector.load %arg4[%c0_4, %c0_5] : memref<64x32xbf16, #tpu.memory_space<vmem>>, vector<64x32xbf16>
    %cst = arith.constant dense<0.000000e+00> : vector<16x32xf32>
    %6 = tpu.matmul %4, %5, %cst {dimension_numbers = #tpu.dot_dimension_numbers<[1], [0], [0], [1], [0, 0, 1, 1], [], []>} : vector<16x64xbf16>, vector<64x32xbf16>, vector<16x32xf32> -> vector<16x32xf32>
    %7 = arith.addf %3, %6 : vector<16x32xf32>
    %c0_6 = arith.constant 0 : index
    %c0_7 = arith.constant 0 : index
    %8 = vector.load %arg7[%c0_6, %c0_7] : memref<16x32xf32, #tpu.memory_space<vmem>>, vector<16x32xf32>
    tpu.vector_store %arg7[%c0_6, %c0_7], %7 {strides = array<i32>} : memref<16x32xf32, #tpu.memory_space<vmem>>, vector<16x32xf32>,
    %c0_i32_8 = arith.constant 0 : i32
    %9 = arith.cmpi eq, %arg2, %c0_i32_8 : i32
    %10 = arith.extui %9 : i1 to i32
    %c0_i32_9 = arith.constant 0 : i32
    %11 = arith.cmpi ne, %10, %c0_i32_9 : i32
    scf.if %11 {
      %c0_10 = arith.constant 0 : index
      %c0_11 = arith.constant 0 : index
      %12 = vector.load %arg7[%c0_10, %c0_11] : memref<16x32xf32, #tpu.memory_space<vmem>>, vector<16x32xf32>
      %c0_12 = arith.constant 0 : index
      %c0_13 = arith.constant 0 : index
      %13 = vector.load %arg5[%c0_12, %c0_13] : memref<1x32xf32, #tpu.memory_space<vmem>>, vector<1x32xf32>
      %14 = vector.broadcast %13 : vector<1x32xf32> to vector<16x32xf32>
      %15 = arith.addf %12, %14 : vector<16x32xf32>
      %16 = arith.truncf %15 : vector<16x32xf32> to vector<16x32xbf16>
      %c0_14 = arith.constant 0 : index
      %c0_15 = arith.constant 0 : index
      %17 = vector.load %arg6[%c0_14, %c0_15] : memref<16x32xbf16, #tpu.memory_space<vmem>>, vector<16x32xbf16>
      tpu.vector_store %arg6[%c0_14, %c0_15], %16 {strides = array<i32>} : memref<16x32xbf16, #tpu.memory_space<vmem>>, vector<16x32xbf16>,
    } else {
    }
    return
  }
  func.func @transform_0(%arg0: i32, %arg1: i32, %arg2: i32) -> (i32, i32) {
    %c0_i32 = arith.constant 0 : i32
    return %arg0, %arg2 : i32, i32
  }
  func.func @transform_1(%arg0: i32, %arg1: i32, %arg2: i32) -> (i32, i32) {
    %c0_i32 = arith.constant 0 : i32
    return %arg2, %arg1 : i32, i32
  }
  func.func @transform_2(%arg0: i32, %arg1: i32, %arg2: i32) -> (i32, i32) {
    %c0_i32 = arith.constant 0 : i32
    %c0_i32_0 = arith.constant 0 : i32
    return %c0_i32, %arg1 : i32, i32
  }
  func.func @transform_3(%arg0: i32, %arg1: i32, %arg2: i32) -> (i32, i32) {
    %c0_i32 = arith.constant 0 : i32
    return %arg0, %arg1 : i32, i32
  }
}

</mosaic_0001>

<llo_original>
// kernel: roberta_classification_forward.16
$region0: #{roberta_classification_forward.16}
  #allocation0 [shape = 'u32[]', space=smem, size = 0x4, offset = 0x4, fixed_abs, tag = 'smem constant byte address 0x4 - core index']
  #allocation1 [shape = 'u32[72,128]{1,0:T(1,128)}', space=vmem, size = 0x9000, scoped, tag = 'internal scratch']
  #allocation2 [shape = 'f32[16,96]{1,0:T(8,128)}', space=vmem, size = 0x2000, scoped, tag = 'scratch operand']
  %s0 = inlined_call_operand.vmem [shape: bf16[16,32], index: 0, kind: input, shape index: {}]
  %s1 = inlined_call_operand.vmem [shape: bf16[32,96], index: 1, kind: input, shape index: {}]
  %s2 = inlined_call_operand.vmem [shape: f32[1,96], index: 2, kind: input, shape index: {}]
  %s3 = inlined_call_operand.vmem [shape: bf16[16,96], index: 3, kind: output, shape index: {}]
  %s4 = sld [smem:[#allocation0]]
  $region30: #{roberta_classification_forward.16} parent=0
    _
  %s6 = ssub.s32 1, %s4
  %s7 = scalar_select 0, %s6, %s4
  // Predicated region
  $region2: #{roberta_classification_forward.16} parent=0 // pred_check
    _
  $region3: #{roberta_classification_forward.16} parent=0 // pred_check_branch
    %9 = sbr.rel (0) target = $region5
  $region4: #{roberta_classification_forward.16} parent=0 // pred_region
    _
  $region5: #{roberta_classification_forward.16} parent=0 // pred_fallthru
    _
  // Predicated region
  $region6: #{roberta_classification_forward.16} parent=0 // pred_check
    _
  $region7: #{roberta_classification_forward.16} parent=0 // pred_check_branch
    %11 = sbr.rel (0) target = $region9
  $region8: #{roberta_classification_forward.16} parent=0 // pred_region
    _
  $region9: #{roberta_classification_forward.16} parent=0 // pred_fallthru
    _
  // Predicated region
  $region10: #{roberta_classification_forward.16} parent=0 // pred_check
    _
  $region11: #{roberta_classification_forward.16} parent=0 // pred_check_branch
    %13 = sbr.rel (0) target = $region13
  $region12: #{roberta_classification_forward.16} parent=0 // pred_region
    _
  $region13: #{roberta_classification_forward.16} parent=0 // pred_fallthru
    _
  %p15 = scmp.eq.s32.totalorder 0, 0
  // Predicated region
  $region14: #{roberta_classification_forward.16} parent=0 // pred_check
    %p16 = pneg %p15
  $region15: #{roberta_classification_forward.16} parent=0 // pred_check_branch
    %18 = sbr.rel (%p16) target = $region17
  $region16: #{roberta_classification_forward.16} parent=0 // pred_region
    %vm19 = vcmask 785408
    %20 = vst.msk [vmem:[#allocation2] sm:$0xff] %vm19, 0.0
    %21 = vst.msk [vmem:[#allocation2 + $0x8] sm:$0xff] %vm19, 0.0
  $region17: #{roberta_classification_forward.16} parent=0 // pred_fallthru
    _
  %v22 = vld [vmem:[#allocation2] sm:$0xff]
  %v23 = vld [vmem:[#allocation2 + $0x8] sm:$0xff]
  %v24 = vld [vmem:[%s0] sm:$0xf]
  %v25 = vld [vmem:[%s0 + $0x4] sm:$0xf]
  %v26 = vld [vmem:[%s1] sm:$0xf]
  %v27 = vld [vmem:[%s1 + $0x4] sm:$0xf]
  %v28 = vld [vmem:[%s1 + $0x8] sm:$0xf]
  %v29 = vld [vmem:[%s1 + $0xc] sm:$0xf]
  %v32 = vunpack.c.l.b16 %v24
  %v33 = vunpack.c.l.b16 %v25
  %v34 = vpack.c.b16 %v33, %v32
  %v39 = vunpack.c.l.b16 %v26
  %v40 = vunpack.c.l.b16 %v27
  %v41 = vunpack.c.l.b16 %v28
  %v42 = vunpack.c.l.b16 %v29
  %v43 = vpack.c.b16 %v40, %v39
  %v44 = vpack.c.b16 %v42, %v41
  %vm47 = vcmask 261120
  %v49 = vsel %vm47, %v34, 0
  %51 = vmatpush.bf16.msra.mxu0 0
  %52 = vmatpush.bf16.msra.mxu0 0
  %53 = vmatpush.bf16.msra.mxu0 0
  %54 = vmatpush.bf16.msra.mxu0 0
  %55 = vmatpush.bf16.msra.mxu0 0
  %56 = vmatpush.bf16.msra.mxu0 0
  %57 = vmatpush.bf16.msra.mxu0 %v44
  %58 = vmatpush.bf16.msra.mxu0 %v43
  %59 = vmatmul.bf16.gmra.mxu0 %v49
  %v60 = vpop.f32.mrf.mxu0
  %v61 = vadd.f32 0.0, %v60
  %v62 = vpop.f32.mrf.mxu0
  %v63 = vadd.f32 0.0, %v62
  %64 = vdwg.mxu0
  %v65 = vadd.f32 %v22, %v61
  %v66 = vadd.f32 %v23, %v63
  %vm67 = vcmask 785408
  %68 = vst.msk [vmem:[#allocation2] sm:$0xff] %vm67, %v65
  %69 = vst.msk [vmem:[#allocation2 + $0x8] sm:$0xff] %vm67, %v66
  // Predicated region
  $region18: #{roberta_classification_forward.16} parent=0 // pred_check
    %p70 = pneg %p15
  $region19: #{roberta_classification_forward.16} parent=0 // pred_check_branch
    %72 = sbr.rel (%p70) target = $region21
  $region20: #{roberta_classification_forward.16} parent=0 // pred_region
    %v73 = vld [vmem:[#allocation2] sm:$0xff]
    %v74 = vld [vmem:[#allocation2 + $0x8] sm:$0xff]
    %v75 = vld [vmem:[%s2] sm:$0x1]
    %v77 = vperm.slane %v75, 0
    %v79 = vadd.f32 %v73, %v77
    %v80 = vadd.f32 %v74, %v77
    %v81 = vpack.c.bf16 %v79, %v79
    %v82 = vpack.c.bf16 %v80, %v80
    %vm83 = vcmask 781312
    %84 = vst.msk [vmem:[%s3] sm:$0xf] %vm83, %v81
    %85 = vst.msk [vmem:[%s3 + $0x4] sm:$0xf] %vm83, %v82
  $region21: #{roberta_classification_forward.16} parent=0 // pred_fallthru
    _
  // Predicated region
  $region22: #{roberta_classification_forward.16} parent=0 // pred_check
    _
  $region23: #{roberta_classification_forward.16} parent=0 // pred_check_branch
    %87 = sbr.rel (0) target = $region25
  $region24: #{roberta_classification_forward.16} parent=0 // pred_region
    _
  $region25: #{roberta_classification_forward.16} parent=0 // pred_fallthru
    _
  // Predicated region
  $region26: #{roberta_classification_forward.16} parent=0 // pred_check
    _
  $region27: #{roberta_classification_forward.16} parent=0 // pred_check_branch
    %89 = sbr.rel (0) target = $region29
  $region28: #{roberta_classification_forward.16} parent=0 // pred_region
    _
  $region29: #{roberta_classification_forward.16} parent=0 // pred_fallthru
    _

// kernel: roberta_classification_forward.18
$region0: #{roberta_classification_forward.18}
  #allocation0 [shape = 'u32[]', space=smem, size = 0x4, offset = 0x4, fixed_abs, tag = 'smem constant byte address 0x4 - core index']
  #allocation1 [shape = 'u32[72,128]{1,0:T(1,128)}', space=vmem, size = 0x9000, scoped, tag = 'internal scratch']
  #allocation2 [shape = 'f32[16,32]{1,0:T(8,128)}', space=vmem, size = 0x2000, scoped, tag = 'scratch operand']
  %s0 = inlined_call_operand.vmem [shape: bf16[16,32], index: 0, kind: input, shape index: {}]
  %s1 = inlined_call_operand.vmem [shape: bf16[32,32], index: 1, kind: input, shape index: {}]
  %s2 = inlined_call_operand.vmem [shape: f32[1,32], index: 2, kind: input, shape index: {}]
  %s3 = inlined_call_operand.vmem [shape: bf16[16,32], index: 3, kind: output, shape index: {}]
  %s4 = sld [smem:[#allocation0]]
  $region30: #{roberta_classification_forward.18} parent=0
    _
  %s6 = ssub.s32 1, %s4
  %s7 = scalar_select 0, %s6, %s4
  // Predicated region
  $region2: #{roberta_classification_forward.18} parent=0 // pred_check
    _
  $region3: #{roberta_classification_forward.18} parent=0 // pred_check_branch
    %9 = sbr.rel (0) target = $region5
  $region4: #{roberta_classification_forward.18} parent=0 // pred_region
    _
  $region5: #{roberta_classification_forward.18} parent=0 // pred_fallthru
    _
  // Predicated region
  $region6: #{roberta_classification_forward.18} parent=0 // pred_check
    _
  $region7: #{roberta_classification_forward.18} parent=0 // pred_check_branch
    %11 = sbr.rel (0) target = $region9
  $region8: #{roberta_classification_forward.18} parent=0 // pred_region
    _
  $region9: #{roberta_classification_forward.18} parent=0 // pred_fallthru
    _
  // Predicated region
  $region10: #{roberta_classification_forward.18} parent=0 // pred_check
    _
  $region11: #{roberta_classification_forward.18} parent=0 // pred_check_branch
    %13 = sbr.rel (0) target = $region13
  $region12: #{roberta_classification_forward.18} parent=0 // pred_region
    _
  $region13: #{roberta_classification_forward.18} parent=0 // pred_fallthru
    _
  %p15 = scmp.eq.s32.totalorder 0, 0
  // Predicated region
  $region14: #{roberta_classification_forward.18} parent=0 // pred_check
    %p16 = pneg %p15
  $region15: #{roberta_classification_forward.18} parent=0 // pred_check_branch
    %18 = sbr.rel (%p16) target = $region17
  $region16: #{roberta_classification_forward.18} parent=0 // pred_region
    %vm19 = vcmask 261120
    %20 = vst.msk [vmem:[#allocation2] sm:$0xff] %vm19, 0.0
    %21 = vst.msk [vmem:[#allocation2 + $0x8] sm:$0xff] %vm19, 0.0
  $region17: #{roberta_classification_forward.18} parent=0 // pred_fallthru
    _
  %v22 = vld [vmem:[#allocation2] sm:$0xff]
  %v23 = vld [vmem:[#allocation2 + $0x8] sm:$0xff]
  %v24 = vld [vmem:[%s0] sm:$0xf]
  %v25 = vld [vmem:[%s0 + $0x4] sm:$0xf]
  %v26 = vld [vmem:[%s1] sm:$0xf]
  %v27 = vld [vmem:[%s1 + $0x4] sm:$0xf]
  %v28 = vld [vmem:[%s1 + $0x8] sm:$0xf]
  %v29 = vld [vmem:[%s1 + $0xc] sm:$0xf]
  %v32 = vunpack.c.l.b16 %v24
  %v33 = vunpack.c.l.b16 %v25
  %v34 = vpack.c.b16 %v33, %v32
  %v39 = vunpack.c.l.b16 %v26
  %v40 = vunpack.c.l.b16 %v27
  %v41 = vunpack.c.l.b16 %v28
  %v42 = vunpack.c.l.b16 %v29
  %v43 = vpack.c.b16 %v40, %v39
  %v44 = vpack.c.b16 %v42, %v41
  %vm47 = vcmask 261120
  %v49 = vsel %vm47, %v34, 0
  %51 = vmatpush.bf16.msra.mxu0 0
  %52 = vmatpush.bf16.msra.mxu0 0
  %53 = vmatpush.bf16.msra.mxu0 0
  %54 = vmatpush.bf16.msra.mxu0 0
  %55 = vmatpush.bf16.msra.mxu0 0
  %56 = vmatpush.bf16.msra.mxu0 0
  %57 = vmatpush.bf16.msra.mxu0 %v44
  %58 = vmatpush.bf16.msra.mxu0 %v43
  %59 = vmatmul.bf16.gmra.mxu0 %v49
  %v60 = vpop.f32.mrf.mxu0
  %v61 = vadd.f32 0.0, %v60
  %v62 = vpop.f32.mrf.mxu0
  %v63 = vadd.f32 0.0, %v62
  %64 = vdwg.mxu0
  %v65 = vadd.f32 %v22, %v61
  %v66 = vadd.f32 %v23, %v63
  %67 = vst.msk [vmem:[#allocation2] sm:$0xff] %vm47, %v65
  %68 = vst.msk [vmem:[#allocation2 + $0x8] sm:$0xff] %vm47, %v66
  // Predicated region
  $region18: #{roberta_classification_forward.18} parent=0 // pred_check
    %p69 = pneg %p15
  $region19: #{roberta_classification_forward.18} parent=0 // pred_check_branch
    %71 = sbr.rel (%p69) target = $region21
  $region20: #{roberta_classification_forward.18} parent=0 // pred_region
    %v72 = vld [vmem:[#allocation2] sm:$0xff]
    %v73 = vld [vmem:[#allocation2 + $0x8] sm:$0xff]
    %v74 = vld [vmem:[%s2] sm:$0x1]
    %v76 = vperm.slane %v74, 0
    %v78 = vadd.f32 %v72, %v76
    %v79 = vadd.f32 %v73, %v76
    %v80 = vpack.c.bf16 %v78, %v78
    %v81 = vpack.c.bf16 %v79, %v79
    %vm82 = vcmask 257024
    %83 = vst.msk [vmem:[%s3] sm:$0xf] %vm82, %v80
    %84 = vst.msk [vmem:[%s3 + $0x4] sm:$0xf] %vm82, %v81
  $region21: #{roberta_classification_forward.18} parent=0 // pred_fallthru
    _
  // Predicated region
  $region22: #{roberta_classification_forward.18} parent=0 // pred_check
    _
  $region23: #{roberta_classification_forward.18} parent=0 // pred_check_branch
    %86 = sbr.rel (0) target = $region25
  $region24: #{roberta_classification_forward.18} parent=0 // pred_region
    _
  $region25: #{roberta_classification_forward.18} parent=0 // pred_fallthru
    _
  // Predicated region
  $region26: #{roberta_classification_forward.18} parent=0 // pred_check
    _
  $region27: #{roberta_classification_forward.18} parent=0 // pred_check_branch
    %88 = sbr.rel (0) target = $region29
  $region28: #{roberta_classification_forward.18} parent=0 // pred_region
    _
  $region29: #{roberta_classification_forward.18} parent=0 // pred_fallthru
    _

// kernel: roberta_classification_forward.15
$region0: #{roberta_classification_forward.15}
  #allocation0 [shape = 'u32[]', space=smem, size = 0x4, offset = 0x4, fixed_abs, tag = 'smem constant byte address 0x4 - core index']
  #allocation1 [shape = 'u32[72,128]{1,0:T(1,128)}', space=vmem, size = 0x9000, scoped, tag = 'internal scratch']
  %s0 = inlined_call_operand.vmem [shape: f32[16,32], index: 0, kind: input, shape index: {}]
  %s1 = inlined_call_operand.vmem [shape: f32[1,32], index: 1, kind: input, shape index: {}]
  %s2 = inlined_call_operand.vmem [shape: f32[1,32], index: 2, kind: input, shape index: {}]
  %s3 = inlined_call_operand.vmem [shape: bf16[16,32], index: 3, kind: output, shape index: {}]
  %s4 = sld [smem:[#allocation0]]
  $region22: #{roberta_classification_forward.15} parent=0
    _
  %s6 = ssub.s32 1, %s4
  %s7 = scalar_select 0, %s6, %s4
  // Predicated region
  $region2: #{roberta_classification_forward.15} parent=0 // pred_check
    _
  $region3: #{roberta_classification_forward.15} parent=0 // pred_check_branch
    %9 = sbr.rel (0) target = $region5
  $region4: #{roberta_classification_forward.15} parent=0 // pred_region
    _
  $region5: #{roberta_classification_forward.15} parent=0 // pred_fallthru
    _
  // Predicated region
  $region6: #{roberta_classification_forward.15} parent=0 // pred_check
    _
  $region7: #{roberta_classification_forward.15} parent=0 // pred_check_branch
    %11 = sbr.rel (0) target = $region9
  $region8: #{roberta_classification_forward.15} parent=0 // pred_region
    _
  $region9: #{roberta_classification_forward.15} parent=0 // pred_fallthru
    _
  // Predicated region
  $region10: #{roberta_classification_forward.15} parent=0 // pred_check
    _
  $region11: #{roberta_classification_forward.15} parent=0 // pred_check_branch
    %13 = sbr.rel (0) target = $region13
  $region12: #{roberta_classification_forward.15} parent=0 // pred_region
    _
  $region13: #{roberta_classification_forward.15} parent=0 // pred_fallthru
    _
  %v14 = vld [vmem:[%s0] sm:$0xff]
  %v15 = vld [vmem:[%s0 + $0x8] sm:$0xff]
  %vm16 = vcmask 261120
  %v17 = vsel %vm16, %v14, 0.0
  %18 = vadd.xlane.f32.xlu0 %v17
  %v19 = vpop.xlane.xlu0 %18
  %v20 = vsel %vm16, %v15, 0.0
  %21 = vadd.xlane.f32.xlu0 %v20
  %v22 = vpop.xlane.xlu0 %21
  %v23 = vrcp.pop 32.0
  %v24 = vmul.f32 32.0, %v23
  %v25 = vsub.f32 1.0, %v24
  %v26 = vmul.f32 %v23, %v25
  %v27 = vadd.f32 %v23, %v26
  %vm28 = vweird.f32 %v23
  %v29 = vsel %vm28, %v23, %v27
  %v30 = vmul.f32 %v19, %v29
  %v31 = vmul.f32 %v22, %v29
  %v32 = vsub.f32 %v14, %v30
  %v33 = vsub.f32 %v15, %v31
  %v34 = vmul.f32 %v32, %v32
  %v35 = vmul.f32 %v33, %v33
  %v36 = vsel %vm16, %v34, 0.0
  %37 = vadd.xlane.f32.xlu0 %v36
  %v38 = vpop.xlane.xlu0 %37
  %v39 = vsel %vm16, %v35, 0.0
  %40 = vadd.xlane.f32.xlu0 %v39
  %v41 = vpop.xlane.xlu0 %40
  %v42 = vmul.f32 %v38, %v29
  %v43 = vmul.f32 %v41, %v29
  %v44 = vadd.f32 %v42, 1e-12
  %v45 = vadd.f32 %v43, 1e-12
  %v46 = vrsqrt.pop %v44
  %v47 = vmul.f32 %v46, %v44
  %v48 = vmul.f32 %v47, %v46
  %v49 = vmul.f32 0.5, %v48
  %v50 = vsub.f32 1.5, %v49
  %v51 = vmul.f32 %v46, %v50
  %vm52 = vweird.f32 %v44
  %vm53 = vweird.f32 %v46
  %vm54 = vmor %vm52, %vm53
  %v55 = vsel %vm54, %v46, %v51
  %v56 = vrsqrt.pop %v45
  %v57 = vmul.f32 %v56, %v45
  %v58 = vmul.f32 %v57, %v56
  %v59 = vmul.f32 0.5, %v58
  %v60 = vsub.f32 1.5, %v59
  %v61 = vmul.f32 %v56, %v60
  %vm62 = vweird.f32 %v45
  %vm63 = vweird.f32 %v56
  %vm64 = vmor %vm62, %vm63
  %v65 = vsel %vm64, %v56, %v61
  %v66 = vmul.f32 %v32, %v55
  %v67 = vmul.f32 %v33, %v65
  %v68 = vld [vmem:[%s1] sm:$0x1]
  %v70 = vperm.slane %v68, 0
  %v72 = vmul.f32 %v66, %v70
  %v73 = vmul.f32 %v67, %v70
  %v74 = vld [vmem:[%s2] sm:$0x1]
  %v76 = vperm.slane %v74, 0
  %v78 = vadd.f32 %v72, %v76
  %v79 = vadd.f32 %v73, %v76
  %v80 = vpack.c.bf16 %v78, %v78
  %v81 = vpack.c.bf16 %v79, %v79
  %vm82 = vcmask 257024
  %83 = vst.msk [vmem:[%s3] sm:$0xf] %vm82, %v80
  %84 = vst.msk [vmem:[%s3 + $0x4] sm:$0xf] %vm82, %v81
  // Predicated region
  $region14: #{roberta_classification_forward.15} parent=0 // pred_check
    _
  $region15: #{roberta_classification_forward.15} parent=0 // pred_check_branch
    %86 = sbr.rel (0) target = $region17
  $region16: #{roberta_classification_forward.15} parent=0 // pred_region
    _
  $region17: #{roberta_classification_forward.15} parent=0 // pred_fallthru
    _
  // Predicated region
  $region18: #{roberta_classification_forward.15} parent=0 // pred_check
    _
  $region19: #{roberta_classification_forward.15} parent=0 // pred_check_branch
    %88 = sbr.rel (0) target = $region21
  $region20: #{roberta_classification_forward.15} parent=0 // pred_region
    _
  $region21: #{roberta_classification_forward.15} parent=0 // pred_fallthru
    _

// kernel: roberta_classification_forward.17
$region0: #{roberta_classification_forward.17}
  #allocation0 [shape = 'u32[]', space=smem, size = 0x4, offset = 0x4, fixed_abs, tag = 'smem constant byte address 0x4 - core index']
  #allocation1 [shape = 'u32[72,128]{1,0:T(1,128)}', space=vmem, size = 0x9000, scoped, tag = 'internal scratch']
  #allocation2 [shape = 'f32[8,1]{1,0:T(8,128)}', space=vmem, size = 0x1000, scoped, tag = 'scratch operand']
  #allocation3 [shape = 'f32[8,1]{1,0:T(8,128)}', space=vmem, size = 0x1000, scoped, tag = 'scratch operand']
  #allocation4 [shape = 'f32[8,16]{1,0:T(8,128)}', space=vmem, size = 0x1000, scoped, tag = 'scratch operand']
  %s0 = inlined_call_operand.vmem [shape: bf16[4,8,16], index: 0, kind: input, shape index: {}]
  %s1 = inlined_call_operand.vmem [shape: bf16[4,8,16], index: 1, kind: input, shape index: {}]
  %s2 = inlined_call_operand.vmem [shape: bf16[4,8,16], index: 2, kind: input, shape index: {}]
  %s3 = inlined_call_operand.vmem [shape: f32[4,1,8], index: 3, kind: input, shape index: {}]
  %s4 = inlined_call_operand.vmem [shape: bf16[4,8,16], index: 4, kind: output, shape index: {}]
  %s5 = sld [smem:[#allocation0]]
  $region57: #{roberta_classification_forward.17} parent=0
    _
  %s7 = ssub.s32 1, %s5
  %s8 = scalar_select 0, %s7, %s5
  loop: start=0, step=1, limit=6
  $region2: #{roberta_classification_forward.17} parent=0 // loop_pre_header
    _
  $region3: #{roberta_classification_forward.17} parent=0 // loop_header
    %s10 = sphi 0, %s14
    %p11 = scmp.ge.s32.totalorder %s10, 6
    %s17 = sphi 0, %s36
    %s18 = sphi 0, %s32
    %s19 = sphi 0, %s28
    %s20 = sphi 0, %s17
    %s21 = sphi 0, %s18
    %s22 = sphi 0, %s19
    %s23 = sphi 0, %s20
    %s24 = sphi 0, %s21
    %s25 = sphi 0, %s22
    %s41 = sphi 0, %s43
    %s44 = sphi 0, %s41
    %s45 = sphi 0, %s44
    %s61 = sphi 0, %s45
    %s69 = sphi 0, %s71
    %s72 = sphi 0, %s69
    %s73 = sphi 0, %s72
    %s89 = sphi 0, %s73
    %s97 = sphi 0, %s99
    %s100 = sphi 0, %s97
    %s101 = sphi 0, %s100
    %s117 = sphi 0, %s101
    %s125 = sphi 0, %s127
    %s128 = sphi 0, %s125
    %s129 = sphi 0, %s128
    %s145 = sphi 0, %s129
    %s153 = sphi 0, %s155
    %s156 = sphi 0, %s153
    %s157 = sphi 0, %s156
    %s173 = sphi 0, %s157
  $region4: #{roberta_classification_forward.17} parent=0 // loop_header_branch
    %13 = sbr.rel (%p11) target = $region8
  $region5: #{roberta_classification_forward.17} parent=0 // loop_body
    %s15 = ssub.s32 %s10, 1
    %s16 = ssub.s32 %s10, 2
    %s26 = sadd.s32 1, %s19
    %p27 = scmp.ge.s32.totalorder %s26, 1
    %s28 = scalar_select %p27, 0, %s26
    %s29 = sadd.s32 1, %s18
    %s30 = scalar_select %p27, %s29, %s18
    %p31 = scmp.ge.s32.totalorder %s30, 1
    %s32 = scalar_select %p31, 0, %s30
    %s33 = sadd.s32 1, %s17
    %s34 = scalar_select %p31, %s33, %s17
    %p35 = scmp.ge.s32.totalorder %s34, 4
    %s36 = scalar_select %p35, 0, %s34
    %s37 = ssub.s32 %s17, %s36
    %s38 = ssub.s32 %s18, %s32
    %s39 = sor.u32 %s37, %s38
    %p40 = scmp.eq.s32.totalorder %s39, 0
    %s42 = sadd.s32 %s41, 1
    %s43 = scalar_select %p40, %s41, %s42
    %p46 = pneg %p40
    %p47 = scmp.eq.s32.totalorder %s10, 3
    %p48 = por %p46, %p47
    %p49 = scmp.ne.s32.totalorder %s41, %s44
    %p50 = scmp.eq.s32.totalorder %s10, 0
    %p51 = por %p49, %p50
    %p52 = scmp.ne.s32.totalorder %s41, %s44
    %p53 = scmp.eq.s32.totalorder %s15, 3
    %p54 = por %p52, %p53
    %p55 = scmp.ne.s32.totalorder %s44, %s45
    %p56 = scmp.eq.s32.totalorder %s15, 0
    %p57 = por %p55, %p56
    %p58 = scmp.ne.s32.totalorder %s44, %s45
    %p59 = scmp.eq.s32.totalorder %s16, 3
    %p60 = por %p58, %p59
    %p62 = scmp.ne.s32.totalorder %s45, %s61
    %p63 = scmp.eq.s32.totalorder %s16, 0
    %p64 = por %p62, %p63
    %s65 = ssub.s32 %s17, %s36
    %s66 = ssub.s32 %s19, %s28
    %s67 = sor.u32 %s65, %s66
    %p68 = scmp.eq.s32.totalorder %s67, 0
    %s70 = sadd.s32 %s69, 1
    %s71 = scalar_select %p68, %s69, %s70
    %p74 = pneg %p68
    %p75 = scmp.eq.s32.totalorder %s10, 3
    %p76 = por %p74, %p75
    %p77 = scmp.ne.s32.totalorder %s69, %s72
    %p78 = scmp.eq.s32.totalorder %s10, 0
    %p79 = por %p77, %p78
    %p80 = scmp.ne.s32.totalorder %s69, %s72
    %p81 = scmp.eq.s32.totalorder %s15, 3
    %p82 = por %p80, %p81
    %p83 = scmp.ne.s32.totalorder %s72, %s73
    %p84 = scmp.eq.s32.totalorder %s15, 0
    %p85 = por %p83, %p84
    %p86 = scmp.ne.s32.totalorder %s72, %s73
    %p87 = scmp.eq.s32.totalorder %s16, 3
    %p88 = por %p86, %p87
    %p90 = scmp.ne.s32.totalorder %s73, %s89
    %p91 = scmp.eq.s32.totalorder %s16, 0
    %p92 = por %p90, %p91
    %s93 = ssub.s32 %s17, %s36
    %s94 = ssub.s32 %s19, %s28
    %s95 = sor.u32 %s93, %s94
    %p96 = scmp.eq.s32.totalorder %s95, 0
    %s98 = sadd.s32 %s97, 1
    %s99 = scalar_select %p96, %s97, %s98
    %p102 = pneg %p96
    %p103 = scmp.eq.s32.totalorder %s10, 3
    %p104 = por %p102, %p103
    %p105 = scmp.ne.s32.totalorder %s97, %s100
    %p106 = scmp.eq.s32.totalorder %s10, 0
    %p107 = por %p105, %p106
    %p108 = scmp.ne.s32.totalorder %s97, %s100
    %p109 = scmp.eq.s32.totalorder %s15, 3
    %p110 = por %p108, %p109
    %p111 = scmp.ne.s32.totalorder %s100, %s101
    %p112 = scmp.eq.s32.totalorder %s15, 0
    %p113 = por %p111, %p112
    %p114 = scmp.ne.s32.totalorder %s100, %s101
    %p115 = scmp.eq.s32.totalorder %s16, 3
    %p116 = por %p114, %p115
    %p118 = scmp.ne.s32.totalorder %s101, %s117
    %p119 = scmp.eq.s32.totalorder %s16, 0
    %p120 = por %p118, %p119
    %s121 = ssub.s32 %s17, %s36
    %s122 = ssub.s32 %s19, %s28
    %s123 = sor.u32 %s121, %s122
    %p124 = scmp.eq.s32.totalorder %s123, 0
    %s126 = sadd.s32 %s125, 1
    %s127 = scalar_select %p124, %s125, %s126
    %p130 = pneg %p124
    %p131 = scmp.eq.s32.totalorder %s10, 3
    %p132 = por %p130, %p131
    %p133 = scmp.ne.s32.totalorder %s125, %s128
    %p134 = scmp.eq.s32.totalorder %s10, 0
    %p135 = por %p133, %p134
    %p136 = scmp.ne.s32.totalorder %s125, %s128
    %p137 = scmp.eq.s32.totalorder %s15, 3
    %p138 = por %p136, %p137
    %p139 = scmp.ne.s32.totalorder %s128, %s129
    %p140 = scmp.eq.s32.totalorder %s15, 0
    %p141 = por %p139, %p140
    %p142 = scmp.ne.s32.totalorder %s128, %s129
    %p143 = scmp.eq.s32.totalorder %s16, 3
    %p144 = por %p142, %p143
    %p146 = scmp.ne.s32.totalorder %s129, %s145
    %p147 = scmp.eq.s32.totalorder %s16, 0
    %p148 = por %p146, %p147
    %s149 = ssub.s32 %s17, %s36
    %s150 = ssub.s32 %s18, %s32
    %s151 = sor.u32 %s149, %s150
    %p152 = scmp.eq.s32.totalorder %s151, 0
    %s154 = sadd.s32 %s153, 1
    %s155 = scalar_select %p152, %s153, %s154
    %p158 = pneg %p152
    %p159 = scmp.eq.s32.totalorder %s10, 3
    %p160 = por %p158, %p159
    %p161 = scmp.ne.s32.totalorder %s153, %s156
    %p162 = scmp.eq.s32.totalorder %s10, 0
    %p163 = por %p161, %p162
    %p164 = scmp.ne.s32.totalorder %s153, %s156
    %p165 = scmp.eq.s32.totalorder %s15, 3
    %p166 = por %p164, %p165
    %p167 = scmp.ne.s32.totalorder %s156, %s157
    %p168 = scmp.eq.s32.totalorder %s15, 0
    %p169 = por %p167, %p168
    %p170 = scmp.ne.s32.totalorder %s156, %s157
    %p171 = scmp.eq.s32.totalorder %s16, 3
    %p172 = por %p170, %p171
    %p174 = scmp.ne.s32.totalorder %s157, %s173
    %p175 = scmp.eq.s32.totalorder %s16, 0
    %p176 = por %p174, %p175
    %p177 = scmp.le.s32.totalorder 1, %s10
    %p178 = scmp.lt.s32.totalorder %s10, 5
    %p179 = pnand %p177, %p178
    %p180 = pneg %p179
    // Predicated region
    $region9: #{roberta_classification_forward.17} parent=5 // pred_check
      _
    $region10: #{roberta_classification_forward.17} parent=5 // pred_check_branch
      %182 = sbr.rel (%p179) target = $region12
    $region11: #{roberta_classification_forward.17} parent=5 // pred_region
      %s183 = ssub.s32 %s10, 1
    $region12: #{roberta_classification_forward.17} parent=5 // pred_fallthru
      _
    %p184 = scmp.lt.s32.totalorder %s10, 4
    // Predicated region
    $region13: #{roberta_classification_forward.17} parent=5 // pred_check
      %p185 = pneg %p184
    $region14: #{roberta_classification_forward.17} parent=5 // pred_check_branch
      %187 = sbr.rel (%p185) target = $region16
    $region15: #{roberta_classification_forward.17} parent=5 // pred_region
      // Predicated region
      $region17: #{roberta_classification_forward.17} parent=15 // pred_check
        %p188 = pneg %p51
      $region18: #{roberta_classification_forward.17} parent=15 // pred_check_branch
        %190 = sbr.rel (%p188) target = $region20
      $region19: #{roberta_classification_forward.17} parent=15 // pred_region
        %p191 = scmp.lt.s32.totalorder %s17, 3
        %s192 = scalar_select %p191, %s17, 3
        %p193 = scmp.lt.s32.totalorder %s18, 0
        %s194 = scalar_select %p193, %s18, 0
        %s195 = sadd.s32 %s194, %s192
        %s196 = smul.addr %s195, 4
        %s197 = scalar_lea.vmem %s0, %s196
      $region20: #{roberta_classification_forward.17} parent=15 // pred_fallthru
        _
      // Predicated region
      $region21: #{roberta_classification_forward.17} parent=15 // pred_check
        %p198 = pneg %p79
      $region22: #{roberta_classification_forward.17} parent=15 // pred_check_branch
        %200 = sbr.rel (%p198) target = $region24
      $region23: #{roberta_classification_forward.17} parent=15 // pred_region
        %p201 = scmp.lt.s32.totalorder %s17, 3
        %s202 = scalar_select %p201, %s17, 3
        %p203 = scmp.lt.s32.totalorder %s19, 0
        %s204 = scalar_select %p203, %s19, 0
        %s205 = sadd.s32 %s204, %s202
        %s206 = smul.addr %s205, 4
        %s207 = scalar_lea.vmem %s1, %s206
      $region24: #{roberta_classification_forward.17} parent=15 // pred_fallthru
        _
      // Predicated region
      $region25: #{roberta_classification_forward.17} parent=15 // pred_check
        %p208 = pneg %p107
      $region26: #{roberta_classification_forward.17} parent=15 // pred_check_branch
        %210 = sbr.rel (%p208) target = $region28
      $region27: #{roberta_classification_forward.17} parent=15 // pred_region
        %p211 = scmp.lt.s32.totalorder %s17, 3
        %s212 = scalar_select %p211, %s17, 3
        %p213 = scmp.lt.s32.totalorder %s19, 0
        %s214 = scalar_select %p213, %s19, 0
        %s215 = sadd.s32 %s214, %s212
        %s216 = smul.addr %s215, 4
        %s217 = scalar_lea.vmem %s2, %s216
      $region28: #{roberta_classification_forward.17} parent=15 // pred_fallthru
        _
      // Predicated region
      $region29: #{roberta_classification_forward.17} parent=15 // pred_check
        %p218 = pneg %p135
      $region30: #{roberta_classification_forward.17} parent=15 // pred_check_branch
        %220 = sbr.rel (%p218) target = $region32
      $region31: #{roberta_classification_forward.17} parent=15 // pred_region
        %p221 = scmp.lt.s32.totalorder %s17, 3
        %s222 = scalar_select %p221, %s17, 3
        %p223 = scmp.lt.s32.totalorder %s19, 0
        %s224 = scalar_select %p223, %s19, 0
        %s225 = sadd.s32 %s224, %s222
        %s226 = scalar_lea.vmem %s3, %s225
      $region32: #{roberta_classification_forward.17} parent=15 // pred_fallthru
        _
    $region16: #{roberta_classification_forward.17} parent=5 // pred_fallthru
      _
    %p227 = scmp.le.s32.totalorder 1, %s10
    %p228 = scmp.lt.s32.totalorder %s10, 5
    %p229 = pnand %p227, %p228
    %p230 = pneg %p229
    // Predicated region
    $region33: #{roberta_classification_forward.17} parent=5 // pred_check
      _
    $region34: #{roberta_classification_forward.17} parent=5 // pred_check_branch
      %232 = sbr.rel (%p229) target = $region36
    $region35: #{roberta_classification_forward.17} parent=5 // pred_region
      %s233 = ssub.s32 %s10, 1
      %p234 = scmp.lt.s32.totalorder %s20, 3
      %s235 = scalar_select %p234, %s20, 3
      %p236 = scmp.lt.s32.totalorder %s21, 0
      %s237 = scalar_select %p236, %s21, 0
      %s238 = sadd.s32 %s237, %s235
      %s239 = smul.addr %s238, 4
      %s240 = scalar_lea.vmem %s0, %s239
      %p241 = pneg %p57
      %p242 = pneg %p54
      %p243 = scmp.lt.s32.totalorder %s20, 3
      %s244 = scalar_select %p243, %s20, 3
      %p245 = scmp.lt.s32.totalorder %s22, 0
      %s246 = scalar_select %p245, %s22, 0
      %s247 = sadd.s32 %s246, %s244
      %s248 = smul.addr %s247, 4
      %s249 = scalar_lea.vmem %s1, %s248
      %p250 = pneg %p85
      %p251 = pneg %p82
      %p252 = scmp.lt.s32.totalorder %s20, 3
      %s253 = scalar_select %p252, %s20, 3
      %p254 = scmp.lt.s32.totalorder %s22, 0
      %s255 = scalar_select %p254, %s22, 0
      %s256 = sadd.s32 %s255, %s253
      %s257 = smul.addr %s256, 4
      %s258 = scalar_lea.vmem %s2, %s257
      %p259 = pneg %p113
      %p260 = pneg %p110
      %p261 = scmp.lt.s32.totalorder %s20, 3
      %s262 = scalar_select %p261, %s20, 3
      %p263 = scmp.lt.s32.totalorder %s22, 0
      %s264 = scalar_select %p263, %s22, 0
      %s265 = sadd.s32 %s264, %s262
      %s266 = scalar_lea.vmem %s3, %s265
      %p267 = pneg %p141
      %p268 = pneg %p138
      %p269 = pneg %p169
      %p270 = pneg %p166
      %p271 = scmp.lt.s32.totalorder %s20, 3
      %s272 = scalar_select %p271, %s20, 3
      %p273 = scmp.lt.s32.totalorder %s21, 0
      %s274 = scalar_select %p273, %s21, 0
      %s275 = sadd.s32 %s274, %s272
      %s276 = smul.addr %s275, 4
      %s277 = scalar_lea.vmem %s4, %s276
      %p278 = scmp.lt.s32.totalorder %s20, 3
      %s279 = scalar_select %p278, %s20, 3
      %p280 = scmp.lt.s32.totalorder %s21, 0
      %s281 = scalar_select %p280, %s21, 0
      %s282 = sadd.s32 %s281, %s279
      %s283 = smul.addr %s282, 4
      %s284 = scalar_lea.vmem %s0, %s283
      %p285 = scmp.lt.s32.totalorder %s20, 3
      %s286 = scalar_select %p285, %s20, 3
      %p287 = scmp.lt.s32.totalorder %s22, 0
      %s288 = scalar_select %p287, %s22, 0
      %s289 = sadd.s32 %s288, %s286
      %s290 = smul.addr %s289, 4
      %s291 = scalar_lea.vmem %s1, %s290
      %p292 = scmp.lt.s32.totalorder %s20, 3
      %s293 = scalar_select %p292, %s20, 3
      %p294 = scmp.lt.s32.totalorder %s22, 0
      %s295 = scalar_select %p294, %s22, 0
      %s296 = sadd.s32 %s295, %s293
      %s297 = smul.addr %s296, 4
      %s298 = scalar_lea.vmem %s2, %s297
      %p299 = scmp.lt.s32.totalorder %s20, 3
      %s300 = scalar_select %p299, %s20, 3
      %p301 = scmp.lt.s32.totalorder %s22, 0
      %s302 = scalar_select %p301, %s22, 0
      %s303 = sadd.s32 %s302, %s300
      %s304 = scalar_lea.vmem %s3, %s303
      %p305 = scmp.lt.s32.totalorder %s20, 3
      %s306 = scalar_select %p305, %s20, 3
      %p307 = scmp.lt.s32.totalorder %s21, 0
      %s308 = scalar_select %p307, %s21, 0
      %s309 = sadd.s32 %s308, %s306
      %s310 = smul.addr %s309, 4
      %s311 = scalar_lea.vmem %s4, %s310
      %p313 = scmp.eq.s32.totalorder %s22, 0
      // Predicated region
      $region37: #{roberta_classification_forward.17} parent=35 // pred_check
        %p314 = pneg %p313
      $region38: #{roberta_classification_forward.17} parent=35 // pred_check_branch
        %316 = sbr.rel (%p314) target = $region40
      $region39: #{roberta_classification_forward.17} parent=35 // pred_region
        %vm317 = vcmask 7168
        %318 = vst.msk [vmem:[#allocation2] sm:$0xff] %vm317, -inf
        %319 = vst.msk [vmem:[#allocation3] sm:$0xff] %vm317, 0.0
        %vm320 = vcmask 130048
        %321 = vst.msk [vmem:[#allocation4] sm:$0xff] %vm320, 0.0
      $region40: #{roberta_classification_forward.17} parent=35 // pred_fallthru
        _
      %v322 = vld [vmem:[%s284] sm:$0xf]
      %v323 = vld [vmem:[%s291] sm:$0xf]
      %v324 = vld [vmem:[%s298] sm:$0xf]
      %vm325 = vcmask 130048
      %v327 = vsel %vm325, %v322, 0
      %v330 = vsel %vm325, %v323, 0
      %332 = vmatpush.bf16.xpose.msra.mxu0 0
      %333 = vmatpush.bf16.xpose.msra.mxu0 0
      %334 = vmatpush.bf16.xpose.msra.mxu0 0
      %335 = vmatpush.bf16.xpose.msra.mxu0 0
      %336 = vmatpush.bf16.xpose.msra.mxu0 0
      %337 = vmatpush.bf16.xpose.msra.mxu0 0
      %338 = vmatpush.bf16.xpose.msra.mxu0 0
      %339 = vmatpush.bf16.xpose.msra.mxu0 %v330
      %340 = vmatmul.bf16.gmra.mxu0 %v327
      %v341 = vpop.f32.mrf.mxu0
      %v342 = vadd.f32 0.0, %v341
      %v343 = vpop.f32.mrf.mxu0
      %344 = vdwg.mxu0
      %v345 = vmul.f32 %v342, 0.25
      %v346 = vld [vmem:[%s304] sm:$0x1]
      %v348 = vperm.slane %v346, 0
      %v350 = vadd.f32 %v345, %v348
      %v351 = vld [vmem:[#allocation2] sm:$0xff]
      %vm352 = vcmask 64512
      %v353 = vsel %vm352, %v350, -inf
      %354 = vmax.xlane.f32.xlu0 %v353
      %v355 = vpop.xlane.xlu0 %354
      %v356 = vmax.f32 %v351, %v355
      %v357 = vsub.f32 %v351, %v356
      %v358 = vmul.f32 %v357, 1.442695
      %v359 = vpow.pop %v358
      %361 = vset.pattern.permute.xlu0 0
      %362 = vperm.xlu0 %361, %v356
      %v363 = vpop.permute.xlu0 %362
      %v365 = vsub.f32 %v350, %v363
      %v366 = vmul.f32 %v365, 1.442695
      %v367 = vpow.pop %v366
      %v368 = vld [vmem:[#allocation3] sm:$0xff]
      %v369 = vmul.f32 %v359, %v368
      %v370 = vsel %vm352, %v367, 0.0
      %371 = vadd.xlane.f32.xlu0 %v370
      %v372 = vpop.xlane.xlu0 %371
      %v373 = vadd.f32 %v369, %v372
      %vm374 = vcmask 7168
      %375 = vst.msk [vmem:[#allocation3] sm:$0xff] %vm374, %v373
      %v376 = vld [vmem:[#allocation4] sm:$0xff]
      %378 = vset.pattern.permute.xlu0 0
      %379 = vperm.xlu0 %378, %v359
      %v380 = vpop.permute.xlu0 %379
      %v382 = vmul.f32 %v380, %v376
      %v383 = vpack.c.bf16 %v367, %v367
      %v385 = vsel %vm352, %v383, 0
      %vm387 = vcmask 1043456
      %v389 = vsel %vm387, %v324, 0
      %391 = vmatpush.bf16.msra.mxu0 0
      %392 = vmatpush.bf16.msra.mxu0 0
      %393 = vmatpush.bf16.msra.mxu0 0
      %394 = vmatpush.bf16.msra.mxu0 0
      %395 = vmatpush.bf16.msra.mxu0 0
      %396 = vmatpush.bf16.msra.mxu0 0
      %397 = vmatpush.bf16.msra.mxu0 0
      %398 = vmatpush.bf16.msra.mxu0 %v389
      %399 = vmatmul.bf16.gmra.mxu0 %v385
      %v400 = vpop.f32.mrf.mxu0
      %v401 = vadd.f32 0.0, %v400
      %v402 = vpop.f32.mrf.mxu0
      %403 = vdwg.mxu0
      %v404 = vadd.f32 %v382, %v401
      %405 = vst.msk [vmem:[#allocation4] sm:$0xff] %vm325, %v404
      %406 = vst.msk [vmem:[#allocation2] sm:$0xff] %vm374, %v356
      // Predicated region
      $region41: #{roberta_classification_forward.17} parent=35 // pred_check
        %p407 = pneg %p313
      $region42: #{roberta_classification_forward.17} parent=35 // pred_check_branch
        %409 = sbr.rel (%p407) target = $region44
      $region43: #{roberta_classification_forward.17} parent=35 // pred_region
        %v410 = vld [vmem:[#allocation3] sm:$0xff]
        %v411 = vrcp.pop %v410
        %v412 = vld [vmem:[#allocation4] sm:$0xff]
        %414 = vset.pattern.permute.xlu0 0
        %415 = vperm.xlu0 %414, %v411
        %v416 = vpop.permute.xlu0 %415
        %v418 = vmul.f32 %v412, %v416
        %v419 = vpack.c.bf16 %v418, %v418
        %vm420 = vcmask 125952
        %421 = vst.msk [vmem:[%s311] sm:$0xf] %vm420, %v419
      $region44: #{roberta_classification_forward.17} parent=35 // pred_fallthru
        _
      %p422 = scmp.lt.s32.totalorder %s20, 3
      %s423 = scalar_select %p422, %s20, 3
      %p424 = scmp.lt.s32.totalorder %s21, 0
      %s425 = scalar_select %p424, %s21, 0
      %s426 = sadd.s32 %s425, %s423
      %s427 = smul.addr %s426, 4
      %s428 = scalar_lea.vmem %s4, %s427
      // Predicated region
      $region45: #{roberta_classification_forward.17} parent=35 // pred_check
        %p429 = pneg %p166
      $region46: #{roberta_classification_forward.17} parent=35 // pred_check_branch
        %431 = sbr.rel (%p429) target = $region48
      $region47: #{roberta_classification_forward.17} parent=35 // pred_region
        _
      $region48: #{roberta_classification_forward.17} parent=35 // pred_fallthru
        _
    $region36: #{roberta_classification_forward.17} parent=5 // pred_fallthru
      _
    %p432 = scmp.le.s32.totalorder 2, %s10
    // Predicated region
    $region49: #{roberta_classification_forward.17} parent=5 // pred_check
      %p433 = pneg %p432
    $region50: #{roberta_classification_forward.17} parent=5 // pred_check_branch
      %435 = sbr.rel (%p433) target = $region52
    $region51: #{roberta_classification_forward.17} parent=5 // pred_region
      %s436 = ssub.s32 %s10, 2
      // Predicated region
      $region53: #{roberta_classification_forward.17} parent=51 // pred_check
        %p437 = pneg %p172
      $region54: #{roberta_classification_forward.17} parent=51 // pred_check_branch
        %439 = sbr.rel (%p437) target = $region56
      $region55: #{roberta_classification_forward.17} parent=51 // pred_region
        %p440 = scmp.lt.s32.totalorder %s23, 3
        %s441 = scalar_select %p440, %s23, 3
        %p442 = scmp.lt.s32.totalorder %s24, 0
        %s443 = scalar_select %p442, %s24, 0
        %s444 = sadd.s32 %s443, %s441
        %s445 = smul.addr %s444, 4
        %s446 = scalar_lea.vmem %s4, %s445
      $region56: #{roberta_classification_forward.17} parent=51 // pred_fallthru
        _
    $region52: #{roberta_classification_forward.17} parent=5 // pred_fallthru
      _
  $region6: #{roberta_classification_forward.17} parent=0 // loop_footer
    %s14 = sadd.s32 1, %s10
  $region7: #{roberta_classification_forward.17} parent=0 // loop_footer_branch
    %9 = sbr.rel target = $region3
  $region8: #{roberta_classification_forward.17} parent=0 // loop_exit
    _

// kernel: roberta_classification_forward.19
$region0: #{roberta_classification_forward.19}
  #allocation0 [shape = 'u32[]', space=smem, size = 0x4, offset = 0x4, fixed_abs, tag = 'smem constant byte address 0x4 - core index']
  #allocation1 [shape = 'u32[72,128]{1,0:T(1,128)}', space=vmem, size = 0x9000, scoped, tag = 'internal scratch']
  %s0 = inlined_call_operand.vmem [shape: bf16[16,32], index: 0, kind: input, shape index: {}]
  %s1 = inlined_call_operand.vmem [shape: bf16[16,32], index: 1, kind: input, shape index: {}]
  %s2 = inlined_call_operand.vmem [shape: f32[1,32], index: 2, kind: input, shape index: {}]
  %s3 = inlined_call_operand.vmem [shape: f32[1,32], index: 3, kind: input, shape index: {}]
  %s4 = inlined_call_operand.vmem [shape: bf16[16,32], index: 4, kind: output, shape index: {}]
  %s5 = sld [smem:[#allocation0]]
  $region26: #{roberta_classification_forward.19} parent=0
    _
  %s7 = ssub.s32 1, %s5
  %s8 = scalar_select 0, %s7, %s5
  // Predicated region
  $region2: #{roberta_classification_forward.19} parent=0 // pred_check
    _
  $region3: #{roberta_classification_forward.19} parent=0 // pred_check_branch
    %10 = sbr.rel (0) target = $region5
  $region4: #{roberta_classification_forward.19} parent=0 // pred_region
    _
  $region5: #{roberta_classification_forward.19} parent=0 // pred_fallthru
    _
  // Predicated region
  $region6: #{roberta_classification_forward.19} parent=0 // pred_check
    _
  $region7: #{roberta_classification_forward.19} parent=0 // pred_check_branch
    %12 = sbr.rel (0) target = $region9
  $region8: #{roberta_classification_forward.19} parent=0 // pred_region
    _
  $region9: #{roberta_classification_forward.19} parent=0 // pred_fallthru
    _
  // Predicated region
  $region10: #{roberta_classification_forward.19} parent=0 // pred_check
    _
  $region11: #{roberta_classification_forward.19} parent=0 // pred_check_branch
    %14 = sbr.rel (0) target = $region13
  $region12: #{roberta_classification_forward.19} parent=0 // pred_region
    _
  $region13: #{roberta_classification_forward.19} parent=0 // pred_fallthru
    _
  // Predicated region
  $region14: #{roberta_classification_forward.19} parent=0 // pred_check
    _
  $region15: #{roberta_classification_forward.19} parent=0 // pred_check_branch
    %16 = sbr.rel (0) target = $region17
  $region16: #{roberta_classification_forward.19} parent=0 // pred_region
    _
  $region17: #{roberta_classification_forward.19} parent=0 // pred_fallthru
    _
  %v17 = vld [vmem:[%s0] sm:$0xf]
  %v18 = vld [vmem:[%s0 + $0x4] sm:$0xf]
  %v19 = vunpack.c.l.bf16 %v17
  %v20 = vunpack.c.l.bf16 %v18
  %v21 = vld [vmem:[%s1] sm:$0xf]
  %v22 = vld [vmem:[%s1 + $0x4] sm:$0xf]
  %v23 = vunpack.c.l.bf16 %v21
  %v24 = vunpack.c.l.bf16 %v22
  %v25 = vadd.f32 %v19, %v23
  %v26 = vadd.f32 %v20, %v24
  %vm27 = vcmask 261120
  %v28 = vsel %vm27, %v25, 0.0
  %29 = vadd.xlane.f32.xlu0 %v28
  %v30 = vpop.xlane.xlu0 %29
  %v31 = vsel %vm27, %v26, 0.0
  %32 = vadd.xlane.f32.xlu0 %v31
  %v33 = vpop.xlane.xlu0 %32
  %v34 = vrcp.pop 32.0
  %v35 = vmul.f32 32.0, %v34
  %v36 = vsub.f32 1.0, %v35
  %v37 = vmul.f32 %v34, %v36
  %v38 = vadd.f32 %v34, %v37
  %vm39 = vweird.f32 %v34
  %v40 = vsel %vm39, %v34, %v38
  %v41 = vmul.f32 %v30, %v40
  %v42 = vmul.f32 %v33, %v40
  %v43 = vsub.f32 %v25, %v41
  %v44 = vsub.f32 %v26, %v42
  %v45 = vmul.f32 %v43, %v43
  %v46 = vmul.f32 %v44, %v44
  %v47 = vsel %vm27, %v45, 0.0
  %48 = vadd.xlane.f32.xlu0 %v47
  %v49 = vpop.xlane.xlu0 %48
  %v50 = vsel %vm27, %v46, 0.0
  %51 = vadd.xlane.f32.xlu0 %v50
  %v52 = vpop.xlane.xlu0 %51
  %v53 = vmul.f32 %v49, %v40
  %v54 = vmul.f32 %v52, %v40
  %v55 = vadd.f32 %v53, 1e-12
  %v56 = vadd.f32 %v54, 1e-12
  %v57 = vrsqrt.pop %v55
  %v58 = vmul.f32 %v57, %v55
  %v59 = vmul.f32 %v58, %v57
  %v60 = vmul.f32 0.5, %v59
  %v61 = vsub.f32 1.5, %v60
  %v62 = vmul.f32 %v57, %v61
  %vm63 = vweird.f32 %v55
  %vm64 = vweird.f32 %v57
  %vm65 = vmor %vm63, %vm64
  %v66 = vsel %vm65, %v57, %v62
  %v67 = vrsqrt.pop %v56
  %v68 = vmul.f32 %v67, %v56
  %v69 = vmul.f32 %v68, %v67
  %v70 = vmul.f32 0.5, %v69
  %v71 = vsub.f32 1.5, %v70
  %v72 = vmul.f32 %v67, %v71
  %vm73 = vweird.f32 %v56
  %vm74 = vweird.f32 %v67
  %vm75 = vmor %vm73, %vm74
  %v76 = vsel %vm75, %v67, %v72
  %v77 = vmul.f32 %v43, %v66
  %v78 = vmul.f32 %v44, %v76
  %v79 = vld [vmem:[%s2] sm:$0x1]
  %v81 = vperm.slane %v79, 0
  %v83 = vmul.f32 %v77, %v81
  %v84 = vmul.f32 %v78, %v81
  %v85 = vld [vmem:[%s3] sm:$0x1]
  %v87 = vperm.slane %v85, 0
  %v89 = vadd.f32 %v83, %v87
  %v90 = vadd.f32 %v84, %v87
  %v91 = vpack.c.bf16 %v89, %v89
  %v92 = vpack.c.bf16 %v90, %v90
  %vm93 = vcmask 257024
  %94 = vst.msk [vmem:[%s4] sm:$0xf] %vm93, %v91
  %95 = vst.msk [vmem:[%s4 + $0x4] sm:$0xf] %vm93, %v92
  // Predicated region
  $region18: #{roberta_classification_forward.19} parent=0 // pred_check
    _
  $region19: #{roberta_classification_forward.19} parent=0 // pred_check_branch
    %97 = sbr.rel (0) target = $region21
  $region20: #{roberta_classification_forward.19} parent=0 // pred_region
    _
  $region21: #{roberta_classification_forward.19} parent=0 // pred_fallthru
    _
  // Predicated region
  $region22: #{roberta_classification_forward.19} parent=0 // pred_check
    _
  $region23: #{roberta_classification_forward.19} parent=0 // pred_check_branch
    %99 = sbr.rel (0) target = $region25
  $region24: #{roberta_classification_forward.19} parent=0 // pred_region
    _
  $region25: #{roberta_classification_forward.19} parent=0 // pred_fallthru
    _

// kernel: roberta_classification_forward.20
$region0: #{roberta_classification_forward.20}
  #allocation0 [shape = 'u32[]', space=smem, size = 0x4, offset = 0x4, fixed_abs, tag = 'smem constant byte address 0x4 - core index']
  #allocation1 [shape = 'u32[72,128]{1,0:T(1,128)}', space=vmem, size = 0x9000, scoped, tag = 'internal scratch']
  #allocation2 [shape = 'f32[16,64]{1,0:T(8,128)}', space=vmem, size = 0x2000, scoped, tag = 'scratch operand']
  %s0 = inlined_call_operand.vmem [shape: bf16[16,32], index: 0, kind: input, shape index: {}]
  %s1 = inlined_call_operand.vmem [shape: bf16[32,64], index: 1, kind: input, shape index: {}]
  %s2 = inlined_call_operand.vmem [shape: f32[1,64], index: 2, kind: input, shape index: {}]
  %s3 = inlined_call_operand.vmem [shape: bf16[16,64], index: 3, kind: output, shape index: {}]
  %s4 = sld [smem:[#allocation0]]
  $region30: #{roberta_classification_forward.20} parent=0
    _
  %s6 = ssub.s32 1, %s4
  %s7 = scalar_select 0, %s6, %s4
  // Predicated region
  $region2: #{roberta_classification_forward.20} parent=0 // pred_check
    _
  $region3: #{roberta_classification_forward.20} parent=0 // pred_check_branch
    %9 = sbr.rel (0) target = $region5
  $region4: #{roberta_classification_forward.20} parent=0 // pred_region
    _
  $region5: #{roberta_classification_forward.20} parent=0 // pred_fallthru
    _
  // Predicated region
  $region6: #{roberta_classification_forward.20} parent=0 // pred_check
    _
  $region7: #{roberta_classification_forward.20} parent=0 // pred_check_branch
    %11 = sbr.rel (0) target = $region9
  $region8: #{roberta_classification_forward.20} parent=0 // pred_region
    _
  $region9: #{roberta_classification_forward.20} parent=0 // pred_fallthru
    _
  // Predicated region
  $region10: #{roberta_classification_forward.20} parent=0 // pred_check
    _
  $region11: #{roberta_classification_forward.20} parent=0 // pred_check_branch
    %13 = sbr.rel (0) target = $region13
  $region12: #{roberta_classification_forward.20} parent=0 // pred_region
    _
  $region13: #{roberta_classification_forward.20} parent=0 // pred_fallthru
    _
  %p15 = scmp.eq.s32.totalorder 0, 0
  // Predicated region
  $region14: #{roberta_classification_forward.20} parent=0 // pred_check
    %p16 = pneg %p15
  $region15: #{roberta_classification_forward.20} parent=0 // pred_check_branch
    %18 = sbr.rel (%p16) target = $region17
  $region16: #{roberta_classification_forward.20} parent=0 // pred_region
    %vm19 = vcmask 523264
    %20 = vst.msk [vmem:[#allocation2] sm:$0xff] %vm19, 0.0
    %21 = vst.msk [vmem:[#allocation2 + $0x8] sm:$0xff] %vm19, 0.0
  $region17: #{roberta_classification_forward.20} parent=0 // pred_fallthru
    _
  %v22 = vld [vmem:[#allocation2] sm:$0xff]
  %v23 = vld [vmem:[#allocation2 + $0x8] sm:$0xff]
  %v24 = vld [vmem:[%s0] sm:$0xf]
  %v25 = vld [vmem:[%s0 + $0x4] sm:$0xf]
  %v26 = vld [vmem:[%s1] sm:$0xf]
  %v27 = vld [vmem:[%s1 + $0x4] sm:$0xf]
  %v28 = vld [vmem:[%s1 + $0x8] sm:$0xf]
  %v29 = vld [vmem:[%s1 + $0xc] sm:$0xf]
  %v32 = vunpack.c.l.b16 %v24
  %v33 = vunpack.c.l.b16 %v25
  %v34 = vpack.c.b16 %v33, %v32
  %v39 = vunpack.c.l.b16 %v26
  %v40 = vunpack.c.l.b16 %v27
  %v41 = vunpack.c.l.b16 %v28
  %v42 = vunpack.c.l.b16 %v29
  %v43 = vpack.c.b16 %v40, %v39
  %v44 = vpack.c.b16 %v42, %v41
  %vm47 = vcmask 261120
  %v49 = vsel %vm47, %v34, 0
  %51 = vmatpush.bf16.msra.mxu0 0
  %52 = vmatpush.bf16.msra.mxu0 0
  %53 = vmatpush.bf16.msra.mxu0 0
  %54 = vmatpush.bf16.msra.mxu0 0
  %55 = vmatpush.bf16.msra.mxu0 0
  %56 = vmatpush.bf16.msra.mxu0 0
  %57 = vmatpush.bf16.msra.mxu0 %v44
  %58 = vmatpush.bf16.msra.mxu0 %v43
  %59 = vmatmul.bf16.gmra.mxu0 %v49
  %v60 = vpop.f32.mrf.mxu0
  %v61 = vadd.f32 0.0, %v60
  %v62 = vpop.f32.mrf.mxu0
  %v63 = vadd.f32 0.0, %v62
  %64 = vdwg.mxu0
  %v65 = vadd.f32 %v22, %v61
  %v66 = vadd.f32 %v23, %v63
  %vm67 = vcmask 523264
  %68 = vst.msk [vmem:[#allocation2] sm:$0xff] %vm67, %v65
  %69 = vst.msk [vmem:[#allocation2 + $0x8] sm:$0xff] %vm67, %v66
  // Predicated region
  $region18: #{roberta_classification_forward.20} parent=0 // pred_check
    %p70 = pneg %p15
  $region19: #{roberta_classification_forward.20} parent=0 // pred_check_branch
    %72 = sbr.rel (%p70) target = $region21
  $region20: #{roberta_classification_forward.20} parent=0 // pred_region
    %v73 = vld [vmem:[#allocation2] sm:$0xff]
    %v74 = vld [vmem:[#allocation2 + $0x8] sm:$0xff]
    %v75 = vld [vmem:[%s2] sm:$0x1]
    %v77 = vperm.slane %v75, 0
    %v79 = vadd.f32 %v73, %v77
    %v80 = vadd.f32 %v74, %v77
    %v81 = vmul.f32 %v79, 0.5
    %v82 = vmul.f32 %v80, 0.5
    %v83 = vmul.f32 %v79, 0.044715
    %v84 = vmul.f32 %v80, 0.044715
    %v85 = vmul.f32 %v83, %v79
    %v86 = vmul.f32 %v84, %v80
    %v87 = vmul.f32 %v85, %v79
    %v88 = vmul.f32 %v86, %v80
    %v89 = vadd.f32 %v79, %v87
    %v90 = vadd.f32 %v80, %v88
    %v91 = vmul.f32 %v89, 0.7978846
    %v92 = vmul.f32 %v90, 0.7978846
    %v93 = vtanh.pop %v91
    %v94 = vtanh.pop %v92
    %v95 = vadd.f32 %v93, 1.0
    %v96 = vadd.f32 %v94, 1.0
    %v97 = vmul.f32 %v81, %v95
    %v98 = vmul.f32 %v82, %v96
    %v99 = vpack.c.bf16 %v97, %v97
    %v100 = vpack.c.bf16 %v98, %v98
    %vm101 = vcmask 519168
    %102 = vst.msk [vmem:[%s3] sm:$0xf] %vm101, %v99
    %103 = vst.msk [vmem:[%s3 + $0x4] sm:$0xf] %vm101, %v100
  $region21: #{roberta_classification_forward.20} parent=0 // pred_fallthru
    _
  // Predicated region
  $region22: #{roberta_classification_forward.20} parent=0 // pred_check
    _
  $region23: #{roberta_classification_forward.20} parent=0 // pred_check_branch
    %105 = sbr.rel (0) target = $region25
  $region24: #{roberta_classification_forward.20} parent=0 // pred_region
    _
  $region25: #{roberta_classification_forward.20} parent=0 // pred_fallthru
    _
  // Predicated region
  $region26: #{roberta_classification_forward.20} parent=0 // pred_check
    _
  $region27: #{roberta_classification_forward.20} parent=0 // pred_check_branch
    %107 = sbr.rel (0) target = $region29
  $region28: #{roberta_classification_forward.20} parent=0 // pred_region
    _
  $region29: #{roberta_classification_forward.20} parent=0 // pred_fallthru
    _

// kernel: roberta_classification_forward.21
$region0: #{roberta_classification_forward.21}
  #allocation0 [shape = 'u32[]', space=smem, size = 0x4, offset = 0x4, fixed_abs, tag = 'smem constant byte address 0x4 - core index']
  #allocation1 [shape = 'u32[72,128]{1,0:T(1,128)}', space=vmem, size = 0x9000, scoped, tag = 'internal scratch']
  #allocation2 [shape = 'f32[16,32]{1,0:T(8,128)}', space=vmem, size = 0x2000, scoped, tag = 'scratch operand']
  %s0 = inlined_call_operand.vmem [shape: bf16[16,64], index: 0, kind: input, shape index: {}]
  %s1 = inlined_call_operand.vmem [shape: bf16[64,32], index: 1, kind: input, shape index: {}]
  %s2 = inlined_call_operand.vmem [shape: f32[1,32], index: 2, kind: input, shape index: {}]
  %s3 = inlined_call_operand.vmem [shape: bf16[16,32], index: 3, kind: output, shape index: {}]
  %s4 = sld [smem:[#allocation0]]
  $region30: #{roberta_classification_forward.21} parent=0
    _
  %s6 = ssub.s32 1, %s4
  %s7 = scalar_select 0, %s6, %s4
  // Predicated region
  $region2: #{roberta_classification_forward.21} parent=0 // pred_check
    _
  $region3: #{roberta_classification_forward.21} parent=0 // pred_check_branch
    %9 = sbr.rel (0) target = $region5
  $region4: #{roberta_classification_forward.21} parent=0 // pred_region
    _
  $region5: #{roberta_classification_forward.21} parent=0 // pred_fallthru
    _
  // Predicated region
  $region6: #{roberta_classification_forward.21} parent=0 // pred_check
    _
  $region7: #{roberta_classification_forward.21} parent=0 // pred_check_branch
    %11 = sbr.rel (0) target = $region9
  $region8: #{roberta_classification_forward.21} parent=0 // pred_region
    _
  $region9: #{roberta_classification_forward.21} parent=0 // pred_fallthru
    _
  // Predicated region
  $region10: #{roberta_classification_forward.21} parent=0 // pred_check
    _
  $region11: #{roberta_classification_forward.21} parent=0 // pred_check_branch
    %13 = sbr.rel (0) target = $region13
  $region12: #{roberta_classification_forward.21} parent=0 // pred_region
    _
  $region13: #{roberta_classification_forward.21} parent=0 // pred_fallthru
    _
  %p15 = scmp.eq.s32.totalorder 0, 0
  // Predicated region
  $region14: #{roberta_classification_forward.21} parent=0 // pred_check
    %p16 = pneg %p15
  $region15: #{roberta_classification_forward.21} parent=0 // pred_check_branch
    %18 = sbr.rel (%p16) target = $region17
  $region16: #{roberta_classification_forward.21} parent=0 // pred_region
    %vm19 = vcmask 261120
    %20 = vst.msk [vmem:[#allocation2] sm:$0xff] %vm19, 0.0
    %21 = vst.msk [vmem:[#allocation2 + $0x8] sm:$0xff] %vm19, 0.0
  $region17: #{roberta_classification_forward.21} parent=0 // pred_fallthru
    _
  %v22 = vld [vmem:[#allocation2] sm:$0xff]
  %v23 = vld [vmem:[#allocation2 + $0x8] sm:$0xff]
  %v24 = vld [vmem:[%s0] sm:$0xf]
  %v25 = vld [vmem:[%s0 + $0x4] sm:$0xf]
  %v26 = vld [vmem:[%s1] sm:$0xf]
  %v27 = vld [vmem:[%s1 + $0x4] sm:$0xf]
  %v28 = vld [vmem:[%s1 + $0x8] sm:$0xf]
  %v29 = vld [vmem:[%s1 + $0xc] sm:$0xf]
  %v30 = vld [vmem:[%s1 + $0x10] sm:$0xf]
  %v31 = vld [vmem:[%s1 + $0x14] sm:$0xf]
  %v32 = vld [vmem:[%s1 + $0x18] sm:$0xf]
  %v33 = vld [vmem:[%s1 + $0x1c] sm:$0xf]
  %v36 = vunpack.c.l.b16 %v24
  %v37 = vunpack.c.l.b16 %v25
  %v38 = vpack.c.b16 %v37, %v36
  %v47 = vunpack.c.l.b16 %v26
  %v48 = vunpack.c.l.b16 %v27
  %v49 = vunpack.c.l.b16 %v28
  %v50 = vunpack.c.l.b16 %v29
  %v51 = vunpack.c.l.b16 %v30
  %v52 = vunpack.c.l.b16 %v31
  %v53 = vunpack.c.l.b16 %v32
  %v54 = vunpack.c.l.b16 %v33
  %v55 = vpack.c.b16 %v48, %v47
  %v56 = vpack.c.b16 %v50, %v49
  %v57 = vpack.c.b16 %v52, %v51
  %v58 = vpack.c.b16 %v54, %v53
  %vm63 = vcmask 523264
  %v65 = vsel %vm63, %v38, 0
  %67 = vmatpush.bf16.msra.mxu0 0
  %68 = vmatpush.bf16.msra.mxu0 0
  %69 = vmatpush.bf16.msra.mxu0 0
  %70 = vmatpush.bf16.msra.mxu0 0
  %71 = vmatpush.bf16.msra.mxu0 %v58
  %72 = vmatpush.bf16.msra.mxu0 %v57
  %73 = vmatpush.bf16.msra.mxu0 %v56
  %74 = vmatpush.bf16.msra.mxu0 %v55
  %75 = vmatmul.bf16.gmra.mxu0 %v65
  %v76 = vpop.f32.mrf.mxu0
  %v77 = vadd.f32 0.0, %v76
  %v78 = vpop.f32.mrf.mxu0
  %v79 = vadd.f32 0.0, %v78
  %80 = vdwg.mxu0
  %v81 = vadd.f32 %v22, %v77
  %v82 = vadd.f32 %v23, %v79
  %vm83 = vcmask 261120
  %84 = vst.msk [vmem:[#allocation2] sm:$0xff] %vm83, %v81
  %85 = vst.msk [vmem:[#allocation2 + $0x8] sm:$0xff] %vm83, %v82
  // Predicated region
  $region18: #{roberta_classification_forward.21} parent=0 // pred_check
    %p86 = pneg %p15
  $region19: #{roberta_classification_forward.21} parent=0 // pred_check_branch
    %88 = sbr.rel (%p86) target = $region21
  $region20: #{roberta_classification_forward.21} parent=0 // pred_region
    %v89 = vld [vmem:[#allocation2] sm:$0xff]
    %v90 = vld [vmem:[#allocation2 + $0x8] sm:$0xff]
    %v91 = vld [vmem:[%s2] sm:$0x1]
    %v93 = vperm.slane %v91, 0
    %v95 = vadd.f32 %v89, %v93
    %v96 = vadd.f32 %v90, %v93
    %v97 = vpack.c.bf16 %v95, %v95
    %v98 = vpack.c.bf16 %v96, %v96
    %vm99 = vcmask 257024
    %100 = vst.msk [vmem:[%s3] sm:$0xf] %vm99, %v97
    %101 = vst.msk [vmem:[%s3 + $0x4] sm:$0xf] %vm99, %v98
  $region21: #{roberta_classification_forward.21} parent=0 // pred_fallthru
    _
  // Predicated region
  $region22: #{roberta_classification_forward.21} parent=0 // pred_check
    _
  $region23: #{roberta_classification_forward.21} parent=0 // pred_check_branch
    %103 = sbr.rel (0) target = $region25
  $region24: #{roberta_classification_forward.21} parent=0 // pred_region
    _
  $region25: #{roberta_classification_forward.21} parent=0 // pred_fallthru
    _
  // Predicated region
  $region26: #{roberta_classification_forward.21} parent=0 // pred_check
    _
  $region27: #{roberta_classification_forward.21} parent=0 // pred_check_branch
    %105 = sbr.rel (0) target = $region29
  $region28: #{roberta_classification_forward.21} parent=0 // pred_region
    _
  $region29: #{roberta_classification_forward.21} parent=0 // pred_fallthru
    _

</llo_original>
